<compile_context>
chip_gen: v6e
topology: v6e:2x2x1
jax: 0.10.0
libtpu: 0.0.40
codegen_flags: <defaults>
</compile_context>

<pallas_src>
import functools

import jax
import jax.numpy as jnp
import numpy as np
from jax import lax
from jax.experimental import pallas as pl
from jax.experimental.pallas import tpu as pltpu

EPS = 1e-5
MXU_DTYPE = jnp.bfloat16  # matmul operand dtype; BN math stays float32


# ---------------------------------------------------------------------------
# Pallas kernel
# ---------------------------------------------------------------------------
def _bn_affine(acc, gamma, beta, g_mat, gt_mat, inv_count):
    """Fold training-mode BatchNorm2d (batch stats, biased var) into an affine.

    acc:    (N*H, W*C) f32 conv output, columns ordered (x, c).
    gamma, beta: (1, C).
    g_mat:  (W*C, C) 0/1 column->channel gather.  gt_mat: (C, W*C) broadcast.
    Returns (scale_row, shift_row), each (1, W*C), so bn(y) == y*scale + shift.
    """
    col_s = jnp.sum(acc, axis=0, keepdims=True)             # (1, W*C)
    col_ss = jnp.sum(acc * acc, axis=0, keepdims=True)      # (1, W*C)
    ch_s = jnp.dot(col_s, g_mat, preferred_element_type=jnp.float32)    # (1, C)
    ch_ss = jnp.dot(col_ss, g_mat, preferred_element_type=jnp.float32)  # (1, C)
    mean = ch_s * inv_count
    var = ch_ss * inv_count - mean * mean                   # biased variance
    scale_c = gamma * lax.rsqrt(var + EPS)
    shift_c = beta - mean * scale_c
    scale_row = jnp.dot(scale_c, gt_mat, preferred_element_type=jnp.float32)
    shift_row = jnp.dot(shift_c, gt_mat, preferred_element_type=jnp.float32)
    return scale_row, shift_row


def resblock_kernel(xph_ref, t1_ref, t2_ref, g1_ref, bt1_ref, g2_ref, bt2_ref,
                    gmat_ref, gtmat_ref, o_ref, hpad_ref, *, n, h, w, c):
    hp = h + 2                    # H-padded rows per image
    r = n * h                     # activation rows
    wc = w * c                    # lane-dense row width
    inv_count = 1.0 / float(n * h * w)

    def conv3x3(src_ref, t_ref):
        # src_ref: (n*hp, wc) H-padded input; t_ref: (3, wc, wc) block-Toeplitz.
        acc = jnp.zeros((r, wc), jnp.float32)
        for kh in range(3):
            rows = [src_ref[i * hp + kh: i * hp + kh + h, :] for i in range(n)]
            lhs = jnp.concatenate(rows, axis=0).astype(MXU_DTYPE)
            acc = acc + jnp.dot(lhs, t_ref[kh],
                                preferred_element_type=jnp.float32)
        return acc

    # ---- conv1 + bn1 + relu (conv bias omitted: cancels in y - mean) -------
    acc1 = conv3x3(xph_ref, t1_ref)
    s1, f1 = _bn_affine(acc1, g1_ref[...], bt1_ref[...],
                        gmat_ref[...], gtmat_ref[...], inv_count)
    h_act = jnp.maximum(acc1 * s1 + f1, 0.0)

    # ---- stage h in an H-padded VMEM scratch (never leaves the chip) -------
    hpad_ref[...] = jnp.zeros((n * hp, wc), jnp.float32)
    for i in range(n):
        hpad_ref[i * hp + 1: i * hp + 1 + h, :] = h_act[i * h:(i + 1) * h, :]

    # ---- conv2 + bn2 + residual + relu --------------------------------------
    acc2 = conv3x3(hpad_ref, t2_ref)
    s2, f2 = _bn_affine(acc2, g2_ref[...], bt2_ref[...],
                        gmat_ref[...], gtmat_ref[...], inv_count)
    residual = jnp.concatenate(
        [xph_ref[i * hp + 1: i * hp + 1 + h, :] for i in range(n)], axis=0)
    o_ref[...] = jnp.maximum(acc2 * s2 + f2 + residual, 0.0)


# ---------------------------------------------------------------------------
# Wrapper (layout plumbing only)
# ---------------------------------------------------------------------------
def _block_toeplitz(w_hwio, width):
    """(3,3,C,C) HWIO weight -> (3, W*C, W*C): 'same' padding along W baked in.

    T[kh][x_in*C + c, x_out*C + o] = w[kh, kw, c, o] with kw = x_in - x_out + 1,
    dropped at the W boundary (== zero padding along W).
    """
    mats = []
    for kh in range(3):
        t = sum(jnp.kron(jnp.eye(width, width, k=1 - kw, dtype=w_hwio.dtype),
                         w_hwio[kh, kw]) for kw in range(3))
        mats.append(t)
    return jnp.stack(mats, axis=0)


def res_block_forward(x_nchw, params):
    """ResBlock forward. x_nchw: (N, C, H, W) float32 (PyTorch layout)."""
    w1, b1, g1, bt1, w2, b2, g2, bt2 = params
    del b1, b2  # conv bias cancels exactly under training-mode BatchNorm
    N, C, H, W = x_nchw.shape
    WC = W * C

    # NCHW -> lane-dense (N*(H+2), W*C) rows, zero-padded along H only.
    x_rows = jnp.transpose(x_nchw, (0, 2, 3, 1)).reshape(N, H, WC)
    xph = jnp.pad(x_rows, ((0, 0), (1, 1), (0, 0))).reshape(N * (H + 2), WC)

    t1 = _block_toeplitz(w1, W).astype(MXU_DTYPE)
    t2 = _block_toeplitz(w2, W).astype(MXU_DTYPE)

    gmat = jnp.tile(jnp.eye(C, dtype=jnp.float32), (W, 1))   # (W*C, C)
    gtmat = gmat.T                                            # (C, W*C)
    row = lambda v: v.reshape(1, C).astype(jnp.float32)

    kernel = functools.partial(resblock_kernel, n=N, h=H, w=W, c=C)
    vmem = lambda: pl.BlockSpec(memory_space=pltpu.MemorySpace.VMEM)
    out = pl.pallas_call(
        kernel,
        out_shape=jax.ShapeDtypeStruct((N * H, WC), jnp.float32),
        in_specs=[vmem() for _ in range(9)],
        out_specs=vmem(),
        scratch_shapes=[pltpu.VMEM((N * (H + 2), WC), jnp.float32)],
    )(xph, t1, t2, row(g1), row(bt1), row(g2), row(bt2), gmat, gtmat)

    # (N*H, W*C) -> NCHW
    return jnp.transpose(out.reshape(N, H, W, C), (0, 3, 1, 2))


# ---------------------------------------------------------------------------
# Pure-JAX reference (PyTorch semantics, f32, with conv bias)
# ---------------------------------------------------------------------------
def res_block_reference(x_nchw, params):
    w1, b1, g1, bt1, w2, b2, g2, bt2 = params
    x = jnp.transpose(x_nchw, (0, 2, 3, 1))

    def conv(h, w, b):
        y = lax.conv_general_dilated(h, w, (1, 1), "SAME",
                                     dimension_numbers=("NHWC", "HWIO", "NHWC"))
        return y + b

    def bn(y, g, bt):
        mean = jnp.mean(y, axis=(0, 1, 2), keepdims=True)
        var = jnp.mean(jnp.square(y - mean), axis=(0, 1, 2), keepdims=True)
        return (y - mean) * lax.rsqrt(var + EPS) * g + bt

    h = jax.nn.relu(bn(conv(x, w1, b1), g1, bt1))
    h = bn(conv(h, w2, b2), g2, bt2) + x
    h = jax.nn.relu(h)
    return jnp.transpose(h, (0, 3, 1, 2))


# ---------------------------------------------------------------------------
if __name__ == "__main__":
    key = jax.random.PRNGKey(0)
    N, C, H, W = 2, 32, 8, 8          # batch=2, num_hidden=32, 8x8 board
    ks = jax.random.split(key, 7)

    x = jax.random.normal(ks[0], (N, C, H, W), jnp.float32)

    fan_in = 9 * C
    w1 = jax.random.normal(ks[1], (3, 3, C, C), jnp.float32) / np.sqrt(fan_in)
    b1 = 0.1 * jax.random.normal(ks[2], (C,), jnp.float32)
    w2 = jax.random.normal(ks[3], (3, 3, C, C), jnp.float32) / np.sqrt(fan_in)
    b2 = 0.1 * jax.random.normal(ks[4], (C,), jnp.float32)
    g1 = 1.0 + 0.1 * jax.random.normal(ks[5], (C,), jnp.float32)
    bt1 = jnp.full((C,), 0.05, jnp.float32)
    g2 = 1.0 + 0.1 * jax.random.normal(ks[6], (C,), jnp.float32)
    bt2 = jnp.full((C,), -0.05, jnp.float32)
    params = (w1, b1, g1, bt1, w2, b2, g2, bt2)

    out = jax.jit(res_block_forward)(x, params)
    out = jax.block_until_ready(out)

    ref = res_block_reference(x, params)
    # Tolerance accounts for bf16 MXU operands vs. a pure-f32 reference.
    np.testing.assert_allclose(np.asarray(out), np.asarray(ref),
                               atol=5e-2, rtol=5e-2)
    print("KERNEL_OK")
</pallas_src>

<mosaic_0001>
module attributes {stable_mosaic.version = 11 : i64} {
  func.func @resblock_kernel(%arg0: memref<20x256xf32, #tpu.memory_space<vmem>>, %arg1: memref<3x256x256xbf16, #tpu.memory_space<vmem>>, %arg2: memref<3x256x256xbf16, #tpu.memory_space<vmem>>, %arg3: memref<1x32xf32, #tpu.memory_space<vmem>>, %arg4: memref<1x32xf32, #tpu.memory_space<vmem>>, %arg5: memref<1x32xf32, #tpu.memory_space<vmem>>, %arg6: memref<1x32xf32, #tpu.memory_space<vmem>>, %arg7: memref<256x32xf32, #tpu.memory_space<vmem>>, %arg8: memref<32x256xf32, #tpu.memory_space<vmem>>, %arg9: memref<16x256xf32, #tpu.memory_space<vmem>>, %arg10: memref<20x256xf32, #tpu.memory_space<vmem>>) attributes {dimension_semantics = [], scalar_prefetch = 0 : i64, scratch_operands = 1 : i64, tpu.core_type = #tpu.core_type<tc>} {
    %cst = arith.constant 0.000000e+00 : f32
    %0 = vector.broadcast %cst : f32 to vector<16x256xf32>
    %c0 = arith.constant 0 : index
    %c0_0 = arith.constant 0 : index
    %1 = vector.load %arg0[%c0, %c0_0] : memref<20x256xf32, #tpu.memory_space<vmem>>, vector<8x256xf32>
    %c10 = arith.constant 10 : index
    %c0_1 = arith.constant 0 : index
    %2 = vector.load %arg0[%c10, %c0_1] : memref<20x256xf32, #tpu.memory_space<vmem>>, vector<8x256xf32>
    %3 = tpu.concatenate %1, %2 in 0 : vector<8x256xf32>, vector<8x256xf32> -> vector<16x256xf32>
    %4 = arith.truncf %3 : vector<16x256xf32> to vector<16x256xbf16>
    %c0_2 = arith.constant 0 : index
    %c0_3 = arith.constant 0 : index
    %c0_4 = arith.constant 0 : index
    %5 = vector.load %arg1[%c0_2, %c0_3, %c0_4] : memref<3x256x256xbf16, #tpu.memory_space<vmem>>, vector<1x256x256xbf16>
    %6 = vector.shape_cast %5 : vector<1x256x256xbf16> to vector<256x256xbf16>
    %cst_5 = arith.constant dense<0.000000e+00> : vector<16x256xf32>
    %7 = tpu.matmul %4, %6, %cst_5 {dimension_numbers = #tpu.dot_dimension_numbers<[1], [0], [0], [1], [0, 0, 1, 1], [], []>} : vector<16x256xbf16>, vector<256x256xbf16>, vector<16x256xf32> -> vector<16x256xf32>
    %8 = arith.addf %0, %7 : vector<16x256xf32>
    %c1 = arith.constant 1 : index
    %c0_6 = arith.constant 0 : index
    %9 = vector.load %arg0[%c1, %c0_6] : memref<20x256xf32, #tpu.memory_space<vmem>>, vector<8x256xf32>
    %c11 = arith.constant 11 : index
    %c0_7 = arith.constant 0 : index
    %10 = vector.load %arg0[%c11, %c0_7] : memref<20x256xf32, #tpu.memory_space<vmem>>, vector<8x256xf32>
    %11 = tpu.concatenate %9, %10 in 0 : vector<8x256xf32>, vector<8x256xf32> -> vector<16x256xf32>
    %12 = arith.truncf %11 : vector<16x256xf32> to vector<16x256xbf16>
    %c1_8 = arith.constant 1 : index
    %c0_9 = arith.constant 0 : index
    %c0_10 = arith.constant 0 : index
    %13 = vector.load %arg1[%c1_8, %c0_9, %c0_10] : memref<3x256x256xbf16, #tpu.memory_space<vmem>>, vector<1x256x256xbf16>
    %14 = vector.shape_cast %13 : vector<1x256x256xbf16> to vector<256x256xbf16>
    %cst_11 = arith.constant dense<0.000000e+00> : vector<16x256xf32>
    %15 = tpu.matmul %12, %14, %cst_11 {dimension_numbers = #tpu.dot_dimension_numbers<[1], [0], [0], [1], [0, 0, 1, 1], [], []>} : vector<16x256xbf16>, vector<256x256xbf16>, vector<16x256xf32> -> vector<16x256xf32>
    %16 = arith.addf %8, %15 : vector<16x256xf32>
    %c2 = arith.constant 2 : index
    %c0_12 = arith.constant 0 : index
    %17 = vector.load %arg0[%c2, %c0_12] : memref<20x256xf32, #tpu.memory_space<vmem>>, vector<8x256xf32>
    %c12 = arith.constant 12 : index
    %c0_13 = arith.constant 0 : index
    %18 = vector.load %arg0[%c12, %c0_13] : memref<20x256xf32, #tpu.memory_space<vmem>>, vector<8x256xf32>
    %19 = tpu.concatenate %17, %18 in 0 : vector<8x256xf32>, vector<8x256xf32> -> vector<16x256xf32>
    %20 = arith.truncf %19 : vector<16x256xf32> to vector<16x256xbf16>
    %c2_14 = arith.constant 2 : index
    %c0_15 = arith.constant 0 : index
    %c0_16 = arith.constant 0 : index
    %21 = vector.load %arg1[%c2_14, %c0_15, %c0_16] : memref<3x256x256xbf16, #tpu.memory_space<vmem>>, vector<1x256x256xbf16>
    %22 = vector.shape_cast %21 : vector<1x256x256xbf16> to vector<256x256xbf16>
    %cst_17 = arith.constant dense<0.000000e+00> : vector<16x256xf32>
    %23 = tpu.matmul %20, %22, %cst_17 {dimension_numbers = #tpu.dot_dimension_numbers<[1], [0], [0], [1], [0, 0, 1, 1], [], []>} : vector<16x256xbf16>, vector<256x256xbf16>, vector<16x256xf32> -> vector<16x256xf32>
    %24 = arith.addf %16, %23 : vector<16x256xf32>
    %c0_18 = arith.constant 0 : index
    %c0_19 = arith.constant 0 : index
    %25 = vector.load %arg3[%c0_18, %c0_19] : memref<1x32xf32, #tpu.memory_space<vmem>>, vector<1x32xf32>
    %c0_20 = arith.constant 0 : index
    %c0_21 = arith.constant 0 : index
    %26 = vector.load %arg4[%c0_20, %c0_21] : memref<1x32xf32, #tpu.memory_space<vmem>>, vector<1x32xf32>
    %c0_22 = arith.constant 0 : index
    %c0_23 = arith.constant 0 : index
    %27 = vector.load %arg7[%c0_22, %c0_23] : memref<256x32xf32, #tpu.memory_space<vmem>>, vector<256x32xf32>
    %c0_24 = arith.constant 0 : index
    %c0_25 = arith.constant 0 : index
    %28 = vector.load %arg8[%c0_24, %c0_25] : memref<32x256xf32, #tpu.memory_space<vmem>>, vector<32x256xf32>
    %cst_26 = arith.constant dense<0.000000e+00> : vector<256xf32>
    %29 = vector.multi_reduction <add>, %24, %cst_26 [0] : vector<16x256xf32> to vector<256xf32>
    %30 = vector.shape_cast %29 : vector<256xf32> to vector<1x256xf32>
    %31 = arith.mulf %24, %24 : vector<16x256xf32>
    %cst_27 = arith.constant dense<0.000000e+00> : vector<256xf32>
    %32 = vector.multi_reduction <add>, %31, %cst_27 [0] : vector<16x256xf32> to vector<256xf32>
    %33 = vector.shape_cast %32 : vector<256xf32> to vector<1x256xf32>
    %cst_28 = arith.constant dense<0.000000e+00> : vector<1x32xf32>
    %34 = tpu.matmul %30, %27, %cst_28 {dimension_numbers = #tpu.dot_dimension_numbers<[1], [0], [0], [1], [0, 0, 1, 1], [], []>} : vector<1x256xf32>, vector<256x32xf32>, vector<1x32xf32> -> vector<1x32xf32>
    %cst_29 = arith.constant dense<0.000000e+00> : vector<1x32xf32>
    %35 = tpu.matmul %33, %27, %cst_29 {dimension_numbers = #tpu.dot_dimension_numbers<[1], [0], [0], [1], [0, 0, 1, 1], [], []>} : vector<1x256xf32>, vector<256x32xf32>, vector<1x32xf32> -> vector<1x32xf32>
    %cst_30 = arith.constant 7.812500e-03 : f32
    %36 = vector.broadcast %cst_30 : f32 to vector<1x32xf32>
    %37 = arith.mulf %34, %36 : vector<1x32xf32>
    %cst_31 = arith.constant 7.812500e-03 : f32
    %38 = vector.broadcast %cst_31 : f32 to vector<1x32xf32>
    %39 = arith.mulf %35, %38 : vector<1x32xf32>
    %40 = arith.mulf %37, %37 : vector<1x32xf32>
    %41 = arith.subf %39, %40 : vector<1x32xf32>
    %cst_32 = arith.constant 9.99999974E-6 : f32
    %42 = vector.broadcast %cst_32 : f32 to vector<1x32xf32>
    %43 = arith.addf %41, %42 : vector<1x32xf32>
    %44 = math.rsqrt %43 : vector<1x32xf32>
    %45 = arith.mulf %25, %44 : vector<1x32xf32>
    %46 = arith.mulf %37, %45 : vector<1x32xf32>
    %47 = arith.subf %26, %46 : vector<1x32xf32>
    %cst_33 = arith.constant dense<0.000000e+00> : vector<1x256xf32>
    %48 = tpu.matmul %45, %28, %cst_33 {dimension_numbers = #tpu.dot_dimension_numbers<[1], [0], [0], [1], [0, 0, 1, 1], [], []>} : vector<1x32xf32>, vector<32x256xf32>, vector<1x256xf32> -> vector<1x256xf32>
    %cst_34 = arith.constant dense<0.000000e+00> : vector<1x256xf32>
    %49 = tpu.matmul %47, %28, %cst_34 {dimension_numbers = #tpu.dot_dimension_numbers<[1], [0], [0], [1], [0, 0, 1, 1], [], []>} : vector<1x32xf32>, vector<32x256xf32>, vector<1x256xf32> -> vector<1x256xf32>
    %50 = vector.broadcast %48 : vector<1x256xf32> to vector<16x256xf32>
    %51 = arith.mulf %24, %50 : vector<16x256xf32>
    %52 = vector.broadcast %49 : vector<1x256xf32> to vector<16x256xf32>
    %53 = arith.addf %51, %52 : vector<16x256xf32>
    %cst_35 = arith.constant 0.000000e+00 : f32
    %54 = vector.broadcast %cst_35 : f32 to vector<16x256xf32>
    %55 = arith.maximumf %53, %54 : vector<16x256xf32>
    %cst_36 = arith.constant 0.000000e+00 : f32
    %56 = vector.broadcast %cst_36 : f32 to vector<20x256xf32>
    %c0_37 = arith.constant 0 : index
    %c0_38 = arith.constant 0 : index
    %57 = vector.load %arg10[%c0_37, %c0_38] : memref<20x256xf32, #tpu.memory_space<vmem>>, vector<20x256xf32>
    tpu.vector_store %arg10[%c0_37, %c0_38], %56 {strides = array<i32>} : memref<20x256xf32, #tpu.memory_space<vmem>>, vector<20x256xf32>,
    %58 = vector.extract_strided_slice %55 {offsets = [0, 0], sizes = [8, 256], strides = [1, 1]} : vector<16x256xf32> to vector<8x256xf32>
    %c1_39 = arith.constant 1 : index
    %c0_40 = arith.constant 0 : index
    %59 = vector.load %arg10[%c1_39, %c0_40] : memref<20x256xf32, #tpu.memory_space<vmem>>, vector<8x256xf32>
    tpu.vector_store %arg10[%c1_39, %c0_40], %58 {strides = array<i32>} : memref<20x256xf32, #tpu.memory_space<vmem>>, vector<8x256xf32>,
    %60 = vector.extract_strided_slice %55 {offsets = [8, 0], sizes = [8, 256], strides = [1, 1]} : vector<16x256xf32> to vector<8x256xf32>
    %c11_41 = arith.constant 11 : index
    %c0_42 = arith.constant 0 : index
    %61 = vector.load %arg10[%c11_41, %c0_42] : memref<20x256xf32, #tpu.memory_space<vmem>>, vector<8x256xf32>
    tpu.vector_store %arg10[%c11_41, %c0_42], %60 {strides = array<i32>} : memref<20x256xf32, #tpu.memory_space<vmem>>, vector<8x256xf32>,
    %cst_43 = arith.constant 0.000000e+00 : f32
    %62 = vector.broadcast %cst_43 : f32 to vector<16x256xf32>
    %c0_44 = arith.constant 0 : index
    %c0_45 = arith.constant 0 : index
    %63 = vector.load %arg10[%c0_44, %c0_45] : memref<20x256xf32, #tpu.memory_space<vmem>>, vector<8x256xf32>
    %c10_46 = arith.constant 10 : index
    %c0_47 = arith.constant 0 : index
    %64 = vector.load %arg10[%c10_46, %c0_47] : memref<20x256xf32, #tpu.memory_space<vmem>>, vector<8x256xf32>
    %65 = tpu.concatenate %63, %64 in 0 : vector<8x256xf32>, vector<8x256xf32> -> vector<16x256xf32>
    %66 = arith.truncf %65 : vector<16x256xf32> to vector<16x256xbf16>
    %c0_48 = arith.constant 0 : index
    %c0_49 = arith.constant 0 : index
    %c0_50 = arith.constant 0 : index
    %67 = vector.load %arg2[%c0_48, %c0_49, %c0_50] : memref<3x256x256xbf16, #tpu.memory_space<vmem>>, vector<1x256x256xbf16>
    %68 = vector.shape_cast %67 : vector<1x256x256xbf16> to vector<256x256xbf16>
    %cst_51 = arith.constant dense<0.000000e+00> : vector<16x256xf32>
    %69 = tpu.matmul %66, %68, %cst_51 {dimension_numbers = #tpu.dot_dimension_numbers<[1], [0], [0], [1], [0, 0, 1, 1], [], []>} : vector<16x256xbf16>, vector<256x256xbf16>, vector<16x256xf32> -> vector<16x256xf32>
    %70 = arith.addf %62, %69 : vector<16x256xf32>
    %c1_52 = arith.constant 1 : index
    %c0_53 = arith.constant 0 : index
    %71 = vector.load %arg10[%c1_52, %c0_53] : memref<20x256xf32, #tpu.memory_space<vmem>>, vector<8x256xf32>
    %c11_54 = arith.constant 11 : index
    %c0_55 = arith.constant 0 : index
    %72 = vector.load %arg10[%c11_54, %c0_55] : memref<20x256xf32, #tpu.memory_space<vmem>>, vector<8x256xf32>
    %73 = tpu.concatenate %71, %72 in 0 : vector<8x256xf32>, vector<8x256xf32> -> vector<16x256xf32>
    %74 = arith.truncf %73 : vector<16x256xf32> to vector<16x256xbf16>
    %c1_56 = arith.constant 1 : index
    %c0_57 = arith.constant 0 : index
    %c0_58 = arith.constant 0 : index
    %75 = vector.load %arg2[%c1_56, %c0_57, %c0_58] : memref<3x256x256xbf16, #tpu.memory_space<vmem>>, vector<1x256x256xbf16>
    %76 = vector.shape_cast %75 : vector<1x256x256xbf16> to vector<256x256xbf16>
    %cst_59 = arith.constant dense<0.000000e+00> : vector<16x256xf32>
    %77 = tpu.matmul %74, %76, %cst_59 {dimension_numbers = #tpu.dot_dimension_numbers<[1], [0], [0], [1], [0, 0, 1, 1], [], []>} : vector<16x256xbf16>, vector<256x256xbf16>, vector<16x256xf32> -> vector<16x256xf32>
    %78 = arith.addf %70, %77 : vector<16x256xf32>
    %c2_60 = arith.constant 2 : index
    %c0_61 = arith.constant 0 : index
    %79 = vector.load %arg10[%c2_60, %c0_61] : memref<20x256xf32, #tpu.memory_space<vmem>>, vector<8x256xf32>
    %c12_62 = arith.constant 12 : index
    %c0_63 = arith.constant 0 : index
    %80 = vector.load %arg10[%c12_62, %c0_63] : memref<20x256xf32, #tpu.memory_space<vmem>>, vector<8x256xf32>
    %81 = tpu.concatenate %79, %80 in 0 : vector<8x256xf32>, vector<8x256xf32> -> vector<16x256xf32>
    %82 = arith.truncf %81 : vector<16x256xf32> to vector<16x256xbf16>
    %c2_64 = arith.constant 2 : index
    %c0_65 = arith.constant 0 : index
    %c0_66 = arith.constant 0 : index
    %83 = vector.load %arg2[%c2_64, %c0_65, %c0_66] : memref<3x256x256xbf16, #tpu.memory_space<vmem>>, vector<1x256x256xbf16>
    %84 = vector.shape_cast %83 : vector<1x256x256xbf16> to vector<256x256xbf16>
    %cst_67 = arith.constant dense<0.000000e+00> : vector<16x256xf32>
    %85 = tpu.matmul %82, %84, %cst_67 {dimension_numbers = #tpu.dot_dimension_numbers<[1], [0], [0], [1], [0, 0, 1, 1], [], []>} : vector<16x256xbf16>, vector<256x256xbf16>, vector<16x256xf32> -> vector<16x256xf32>
    %86 = arith.addf %78, %85 : vector<16x256xf32>
    %c0_68 = arith.constant 0 : index
    %c0_69 = arith.constant 0 : index
    %87 = vector.load %arg5[%c0_68, %c0_69] : memref<1x32xf32, #tpu.memory_space<vmem>>, vector<1x32xf32>
    %c0_70 = arith.constant 0 : index
    %c0_71 = arith.constant 0 : index
    %88 = vector.load %arg6[%c0_70, %c0_71] : memref<1x32xf32, #tpu.memory_space<vmem>>, vector<1x32xf32>
    %c0_72 = arith.constant 0 : index
    %c0_73 = arith.constant 0 : index
    %89 = vector.load %arg7[%c0_72, %c0_73] : memref<256x32xf32, #tpu.memory_space<vmem>>, vector<256x32xf32>
    %c0_74 = arith.constant 0 : index
    %c0_75 = arith.constant 0 : index
    %90 = vector.load %arg8[%c0_74, %c0_75] : memref<32x256xf32, #tpu.memory_space<vmem>>, vector<32x256xf32>
    %cst_76 = arith.constant dense<0.000000e+00> : vector<256xf32>
    %91 = vector.multi_reduction <add>, %86, %cst_76 [0] : vector<16x256xf32> to vector<256xf32>
    %92 = vector.shape_cast %91 : vector<256xf32> to vector<1x256xf32>
    %93 = arith.mulf %86, %86 : vector<16x256xf32>
    %cst_77 = arith.constant dense<0.000000e+00> : vector<256xf32>
    %94 = vector.multi_reduction <add>, %93, %cst_77 [0] : vector<16x256xf32> to vector<256xf32>
    %95 = vector.shape_cast %94 : vector<256xf32> to vector<1x256xf32>
    %cst_78 = arith.constant dense<0.000000e+00> : vector<1x32xf32>
    %96 = tpu.matmul %92, %89, %cst_78 {dimension_numbers = #tpu.dot_dimension_numbers<[1], [0], [0], [1], [0, 0, 1, 1], [], []>} : vector<1x256xf32>, vector<256x32xf32>, vector<1x32xf32> -> vector<1x32xf32>
    %cst_79 = arith.constant dense<0.000000e+00> : vector<1x32xf32>
    %97 = tpu.matmul %95, %89, %cst_79 {dimension_numbers = #tpu.dot_dimension_numbers<[1], [0], [0], [1], [0, 0, 1, 1], [], []>} : vector<1x256xf32>, vector<256x32xf32>, vector<1x32xf32> -> vector<1x32xf32>
    %cst_80 = arith.constant 7.812500e-03 : f32
    %98 = vector.broadcast %cst_80 : f32 to vector<1x32xf32>
    %99 = arith.mulf %96, %98 : vector<1x32xf32>
    %cst_81 = arith.constant 7.812500e-03 : f32
    %100 = vector.broadcast %cst_81 : f32 to vector<1x32xf32>
    %101 = arith.mulf %97, %100 : vector<1x32xf32>
    %102 = arith.mulf %99, %99 : vector<1x32xf32>
    %103 = arith.subf %101, %102 : vector<1x32xf32>
    %cst_82 = arith.constant 9.99999974E-6 : f32
    %104 = vector.broadcast %cst_82 : f32 to vector<1x32xf32>
    %105 = arith.addf %103, %104 : vector<1x32xf32>
    %106 = math.rsqrt %105 : vector<1x32xf32>
    %107 = arith.mulf %87, %106 : vector<1x32xf32>
    %108 = arith.mulf %99, %107 : vector<1x32xf32>
    %109 = arith.subf %88, %108 : vector<1x32xf32>
    %cst_83 = arith.constant dense<0.000000e+00> : vector<1x256xf32>
    %110 = tpu.matmul %107, %90, %cst_83 {dimension_numbers = #tpu.dot_dimension_numbers<[1], [0], [0], [1], [0, 0, 1, 1], [], []>} : vector<1x32xf32>, vector<32x256xf32>, vector<1x256xf32> -> vector<1x256xf32>
    %cst_84 = arith.constant dense<0.000000e+00> : vector<1x256xf32>
    %111 = tpu.matmul %109, %90, %cst_84 {dimension_numbers = #tpu.dot_dimension_numbers<[1], [0], [0], [1], [0, 0, 1, 1], [], []>} : vector<1x32xf32>, vector<32x256xf32>, vector<1x256xf32> -> vector<1x256xf32>
    %c1_85 = arith.constant 1 : index
    %c0_86 = arith.constant 0 : index
    %112 = vector.load %arg0[%c1_85, %c0_86] : memref<20x256xf32, #tpu.memory_space<vmem>>, vector<8x256xf32>
    %c11_87 = arith.constant 11 : index
    %c0_88 = arith.constant 0 : index
    %113 = vector.load %arg0[%c11_87, %c0_88] : memref<20x256xf32, #tpu.memory_space<vmem>>, vector<8x256xf32>
    %114 = tpu.concatenate %112, %113 in 0 : vector<8x256xf32>, vector<8x256xf32> -> vector<16x256xf32>
    %115 = vector.broadcast %110 : vector<1x256xf32> to vector<16x256xf32>
    %116 = arith.mulf %86, %115 : vector<16x256xf32>
    %117 = vector.broadcast %111 : vector<1x256xf32> to vector<16x256xf32>
    %118 = arith.addf %116, %117 : vector<16x256xf32>
    %119 = arith.addf %118, %114 : vector<16x256xf32>
    %cst_89 = arith.constant 0.000000e+00 : f32
    %120 = vector.broadcast %cst_89 : f32 to vector<16x256xf32>
    %121 = arith.maximumf %119, %120 : vector<16x256xf32>
    %c0_90 = arith.constant 0 : index
    %c0_91 = arith.constant 0 : index
    %122 = vector.load %arg9[%c0_90, %c0_91] : memref<16x256xf32, #tpu.memory_space<vmem>>, vector<16x256xf32>
    tpu.vector_store %arg9[%c0_90, %c0_91], %121 {strides = array<i32>} : memref<16x256xf32, #tpu.memory_space<vmem>>, vector<16x256xf32>,
    return
  }
}

</mosaic_0001>

<llo_original>
// kernel: tile.9
$region0: #{tile.9}
  %s0 = inlined_call_operand.vmem [shape: f32[8,32,32], index: 0, kind: input, shape index: {}]
  %s1 = inlined_call_operand.vmem [shape: f32[256,32], index: 1, kind: output, shape index: {}]
  %v2 = vld [vmem:[%s0] ss:$4 sm:$0xff]
  %vm3 = vcmask 261120
  %4 = vst.msk [vmem:[%s1] ss:$8 sm:$0x3] %vm3, %v2
  %s5 = scalar_lea.vmem %s1, 4294967281
  %6 = vst.msk [vmem:[%s5] ss:$8 sm:$0xc] %vm3, %v2
  %s7 = scalar_lea.vmem %s1, 4294967266
  %8 = vst.msk [vmem:[%s7] ss:$8 sm:$0x30] %vm3, %v2
  %s9 = scalar_lea.vmem %s1, 4294967251
  %10 = vst.msk [vmem:[%s9] ss:$8 sm:$0xc0] %vm3, %v2
  %s11 = scalar_lea.vmem %s0, 32
  %v12 = vld [vmem:[%s11] ss:$4 sm:$0xff]
  %vm13 = vcmask 261120
  %s14 = scalar_lea.vmem %s1, 4
  %15 = vst.msk [vmem:[%s14] ss:$8 sm:$0x3] %vm13, %v12
  %s16 = scalar_lea.vmem %s1, 4294967285
  %17 = vst.msk [vmem:[%s16] ss:$8 sm:$0xc] %vm13, %v12
  %s18 = scalar_lea.vmem %s1, 4294967270
  %19 = vst.msk [vmem:[%s18] ss:$8 sm:$0x30] %vm13, %v12
  %s20 = scalar_lea.vmem %s1, 4294967255
  %21 = vst.msk [vmem:[%s20] ss:$8 sm:$0xc0] %vm13, %v12
  %s22 = scalar_lea.vmem %s0, 64
  %v23 = vld [vmem:[%s22] ss:$4 sm:$0xff]
  %vm24 = vcmask 261120
  %s25 = scalar_lea.vmem %s1, 16
  %26 = vst.msk [vmem:[%s25] ss:$8 sm:$0x3] %vm24, %v23
  %s27 = scalar_lea.vmem %s1, 1
  %28 = vst.msk [vmem:[%s27] ss:$8 sm:$0xc] %vm24, %v23
  %s29 = scalar_lea.vmem %s1, 4294967282
  %30 = vst.msk [vmem:[%s29] ss:$8 sm:$0x30] %vm24, %v23
  %s31 = scalar_lea.vmem %s1, 4294967267
  %32 = vst.msk [vmem:[%s31] ss:$8 sm:$0xc0] %vm24, %v23
  %s33 = scalar_lea.vmem %s0, 96
  %v34 = vld [vmem:[%s33] ss:$4 sm:$0xff]
  %vm35 = vcmask 261120
  %s36 = scalar_lea.vmem %s1, 20
  %37 = vst.msk [vmem:[%s36] ss:$8 sm:$0x3] %vm35, %v34
  %s38 = scalar_lea.vmem %s1, 5
  %39 = vst.msk [vmem:[%s38] ss:$8 sm:$0xc] %vm35, %v34
  %s40 = scalar_lea.vmem %s1, 4294967286
  %41 = vst.msk [vmem:[%s40] ss:$8 sm:$0x30] %vm35, %v34
  %s42 = scalar_lea.vmem %s1, 4294967271
  %43 = vst.msk [vmem:[%s42] ss:$8 sm:$0xc0] %vm35, %v34
  %s44 = scalar_lea.vmem %s0, 128
  %v45 = vld [vmem:[%s44] ss:$4 sm:$0xff]
  %vm46 = vcmask 261120
  %s47 = scalar_lea.vmem %s1, 32
  %48 = vst.msk [vmem:[%s47] ss:$8 sm:$0x3] %vm46, %v45
  %s49 = scalar_lea.vmem %s1, 17
  %50 = vst.msk [vmem:[%s49] ss:$8 sm:$0xc] %vm46, %v45
  %s51 = scalar_lea.vmem %s1, 2
  %52 = vst.msk [vmem:[%s51] ss:$8 sm:$0x30] %vm46, %v45
  %s53 = scalar_lea.vmem %s1, 4294967283
  %54 = vst.msk [vmem:[%s53] ss:$8 sm:$0xc0] %vm46, %v45
  %s55 = scalar_lea.vmem %s0, 160
  %v56 = vld [vmem:[%s55] ss:$4 sm:$0xff]
  %vm57 = vcmask 261120
  %s58 = scalar_lea.vmem %s1, 36
  %59 = vst.msk [vmem:[%s58] ss:$8 sm:$0x3] %vm57, %v56
  %s60 = scalar_lea.vmem %s1, 21
  %61 = vst.msk [vmem:[%s60] ss:$8 sm:$0xc] %vm57, %v56
  %s62 = scalar_lea.vmem %s1, 6
  %63 = vst.msk [vmem:[%s62] ss:$8 sm:$0x30] %vm57, %v56
  %s64 = scalar_lea.vmem %s1, 4294967287
  %65 = vst.msk [vmem:[%s64] ss:$8 sm:$0xc0] %vm57, %v56
  %s66 = scalar_lea.vmem %s0, 192
  %v67 = vld [vmem:[%s66] ss:$4 sm:$0xff]
  %vm68 = vcmask 261120
  %s69 = scalar_lea.vmem %s1, 48
  %70 = vst.msk [vmem:[%s69] ss:$8 sm:$0x3] %vm68, %v67
  %s71 = scalar_lea.vmem %s1, 33
  %72 = vst.msk [vmem:[%s71] ss:$8 sm:$0xc] %vm68, %v67
  %s73 = scalar_lea.vmem %s1, 18
  %74 = vst.msk [vmem:[%s73] ss:$8 sm:$0x30] %vm68, %v67
  %s75 = scalar_lea.vmem %s1, 3
  %76 = vst.msk [vmem:[%s75] ss:$8 sm:$0xc0] %vm68, %v67
  %s77 = scalar_lea.vmem %s0, 224
  %v78 = vld [vmem:[%s77] ss:$4 sm:$0xff]
  %vm79 = vcmask 261120
  %s80 = scalar_lea.vmem %s1, 52
  %81 = vst.msk [vmem:[%s80] ss:$8 sm:$0x3] %vm79, %v78
  %s82 = scalar_lea.vmem %s1, 37
  %83 = vst.msk [vmem:[%s82] ss:$8 sm:$0xc] %vm79, %v78
  %s84 = scalar_lea.vmem %s1, 22
  %85 = vst.msk [vmem:[%s84] ss:$8 sm:$0x30] %vm79, %v78
  %s86 = scalar_lea.vmem %s1, 7
  %87 = vst.msk [vmem:[%s86] ss:$8 sm:$0xc0] %vm79, %v78
  %s88 = scalar_lea.vmem %s0, 3
  %v89 = vld [vmem:[%s88] ss:$8 sm:$0xf]
  %s90 = scalar_lea.vmem %s0, 3
  %v91 = vld [vmem:[%s90] ss:$8 sm:$0xf0]
  %vm92 = vcmask 1047556
  %v93 = vsel %vm92, %v91, %v89
  %94 = vrot.lane.b32.xlu0 %v93, 96
  %v95 = vpop.permute.xlu0 %94
  %vm96 = vcmask 1048320
  %97 = vst.msk [vmem:[%s1] sm:$0xff] %vm96, %v95
  %s98 = scalar_lea.vmem %s0, 131
  %v99 = vld [vmem:[%s98] ss:$8 sm:$0xf]
  %s100 = scalar_lea.vmem %s0, 131
  %v101 = vld [vmem:[%s100] ss:$8 sm:$0xf0]
  %vm102 = vcmask 1047556
  %v103 = vsel %vm102, %v101, %v99
  %104 = vrot.lane.b32.xlu0 %v103, 96
  %v105 = vpop.permute.xlu0 %104
  %vm106 = vcmask 1048320
  %s107 = scalar_lea.vmem %s1, 32
  %108 = vst.msk [vmem:[%s107] sm:$0xff] %vm106, %v105
  %s109 = scalar_lea.vmem %s0, 7
  %v110 = vld [vmem:[%s109] ss:$8 sm:$0xf]
  %s111 = scalar_lea.vmem %s0, 7
  %v112 = vld [vmem:[%s111] ss:$8 sm:$0xf0]
  %vm113 = vcmask 1047556
  %v114 = vsel %vm113, %v112, %v110
  %115 = vrot.lane.b32.xlu0 %v114, 96
  %v116 = vpop.permute.xlu0 %115
  %vm117 = vcmask 1048320
  %s118 = scalar_lea.vmem %s1, 8
  %119 = vst.msk [vmem:[%s118] sm:$0xff] %vm117, %v116
  %s120 = scalar_lea.vmem %s0, 135
  %v121 = vld [vmem:[%s120] ss:$8 sm:$0xf]
  %s122 = scalar_lea.vmem %s0, 135
  %v123 = vld [vmem:[%s122] ss:$8 sm:$0xf0]
  %vm124 = vcmask 1047556
  %v125 = vsel %vm124, %v123, %v121
  %126 = vrot.lane.b32.xlu0 %v125, 96
  %v127 = vpop.permute.xlu0 %126
  %vm128 = vcmask 1048320
  %s129 = scalar_lea.vmem %s1, 40
  %130 = vst.msk [vmem:[%s129] sm:$0xff] %vm128, %v127
  %s131 = scalar_lea.vmem %s0, 67
  %v132 = vld [vmem:[%s131] ss:$8 sm:$0xf]
  %s133 = scalar_lea.vmem %s0, 67
  %v134 = vld [vmem:[%s133] ss:$8 sm:$0xf0]
  %vm135 = vcmask 1047556
  %v136 = vsel %vm135, %v134, %v132
  %137 = vrot.lane.b32.xlu0 %v136, 96
  %v138 = vpop.permute.xlu0 %137
  %vm139 = vcmask 1048320
  %s140 = scalar_lea.vmem %s1, 16
  %141 = vst.msk [vmem:[%s140] sm:$0xff] %vm139, %v138
  %s142 = scalar_lea.vmem %s0, 195
  %v143 = vld [vmem:[%s142] ss:$8 sm:$0xf]
  %s144 = scalar_lea.vmem %s0, 195
  %v145 = vld [vmem:[%s144] ss:$8 sm:$0xf0]
  %vm146 = vcmask 1047556
  %v147 = vsel %vm146, %v145, %v143
  %148 = vrot.lane.b32.xlu0 %v147, 96
  %v149 = vpop.permute.xlu0 %148
  %vm150 = vcmask 1048320
  %s151 = scalar_lea.vmem %s1, 48
  %152 = vst.msk [vmem:[%s151] sm:$0xff] %vm150, %v149
  %s153 = scalar_lea.vmem %s0, 71
  %v154 = vld [vmem:[%s153] ss:$8 sm:$0xf]
  %s155 = scalar_lea.vmem %s0, 71
  %v156 = vld [vmem:[%s155] ss:$8 sm:$0xf0]
  %vm157 = vcmask 1047556
  %v158 = vsel %vm157, %v156, %v154
  %159 = vrot.lane.b32.xlu0 %v158, 96
  %v160 = vpop.permute.xlu0 %159
  %vm161 = vcmask 1048320
  %s162 = scalar_lea.vmem %s1, 24
  %163 = vst.msk [vmem:[%s162] sm:$0xff] %vm161, %v160
  %s164 = scalar_lea.vmem %s0, 199
  %v165 = vld [vmem:[%s164] ss:$8 sm:$0xf]
  %s166 = scalar_lea.vmem %s0, 199
  %v167 = vld [vmem:[%s166] ss:$8 sm:$0xf0]
  %vm168 = vcmask 1047556
  %v169 = vsel %vm168, %v167, %v165
  %170 = vrot.lane.b32.xlu0 %v169, 96
  %v171 = vpop.permute.xlu0 %170
  %vm172 = vcmask 1048320
  %s173 = scalar_lea.vmem %s1, 56
  %174 = vst.msk [vmem:[%s173] sm:$0xff] %vm172, %v171
  %s175 = scalar_lea.vmem %s0, 2
  %v176 = vld [vmem:[%s175] ss:$8 sm:$0xf]
  %s177 = scalar_lea.vmem %s0, 2
  %v178 = vld [vmem:[%s177] ss:$8 sm:$0xf0]
  %vm179 = vcmask 1047556
  %v180 = vsel %vm179, %v178, %v176
  %181 = vrot.lane.b32.xlu0 %v180, 64
  %v182 = vpop.permute.xlu0 %181
  %vm183 = vcmask 785920
  %184 = vst.msk [vmem:[%s1] sm:$0xff] %vm183, %v182
  %s185 = scalar_lea.vmem %s0, 130
  %v186 = vld [vmem:[%s185] ss:$8 sm:$0xf]
  %s187 = scalar_lea.vmem %s0, 130
  %v188 = vld [vmem:[%s187] ss:$8 sm:$0xf0]
  %vm189 = vcmask 1047556
  %v190 = vsel %vm189, %v188, %v186
  %191 = vrot.lane.b32.xlu0 %v190, 64
  %v192 = vpop.permute.xlu0 %191
  %vm193 = vcmask 785920
  %s194 = scalar_lea.vmem %s1, 32
  %195 = vst.msk [vmem:[%s194] sm:$0xff] %vm193, %v192
  %s196 = scalar_lea.vmem %s0, 6
  %v197 = vld [vmem:[%s196] ss:$8 sm:$0xf]
  %s198 = scalar_lea.vmem %s0, 6
  %v199 = vld [vmem:[%s198] ss:$8 sm:$0xf0]
  %vm200 = vcmask 1047556
  %v201 = vsel %vm200, %v199, %v197
  %202 = vrot.lane.b32.xlu0 %v201, 64
  %v203 = vpop.permute.xlu0 %202
  %vm204 = vcmask 785920
  %s205 = scalar_lea.vmem %s1, 8
  %206 = vst.msk [vmem:[%s205] sm:$0xff] %vm204, %v203
  %s207 = scalar_lea.vmem %s0, 134
  %v208 = vld [vmem:[%s207] ss:$8 sm:$0xf]
  %s209 = scalar_lea.vmem %s0, 134
  %v210 = vld [vmem:[%s209] ss:$8 sm:$0xf0]
  %vm211 = vcmask 1047556
  %v212 = vsel %vm211, %v210, %v208
  %213 = vrot.lane.b32.xlu0 %v212, 64
  %v214 = vpop.permute.xlu0 %213
  %vm215 = vcmask 785920
  %s216 = scalar_lea.vmem %s1, 40
  %217 = vst.msk [vmem:[%s216] sm:$0xff] %vm215, %v214
  %s218 = scalar_lea.vmem %s0, 66
  %v219 = vld [vmem:[%s218] ss:$8 sm:$0xf]
  %s220 = scalar_lea.vmem %s0, 66
  %v221 = vld [vmem:[%s220] ss:$8 sm:$0xf0]
  %vm222 = vcmask 1047556
  %v223 = vsel %vm222, %v221, %v219
  %224 = vrot.lane.b32.xlu0 %v223, 64
  %v225 = vpop.permute.xlu0 %224
  %vm226 = vcmask 785920
  %s227 = scalar_lea.vmem %s1, 16
  %228 = vst.msk [vmem:[%s227] sm:$0xff] %vm226, %v225
  %s229 = scalar_lea.vmem %s0, 194
  %v230 = vld [vmem:[%s229] ss:$8 sm:$0xf]
  %s231 = scalar_lea.vmem %s0, 194
  %v232 = vld [vmem:[%s231] ss:$8 sm:$0xf0]
  %vm233 = vcmask 1047556
  %v234 = vsel %vm233, %v232, %v230
  %235 = vrot.lane.b32.xlu0 %v234, 64
  %v236 = vpop.permute.xlu0 %235
  %vm237 = vcmask 785920
  %s238 = scalar_lea.vmem %s1, 48
  %239 = vst.msk [vmem:[%s238] sm:$0xff] %vm237, %v236
  %s240 = scalar_lea.vmem %s0, 70
  %v241 = vld [vmem:[%s240] ss:$8 sm:$0xf]
  %s242 = scalar_lea.vmem %s0, 70
  %v243 = vld [vmem:[%s242] ss:$8 sm:$0xf0]
  %vm244 = vcmask 1047556
  %v245 = vsel %vm244, %v243, %v241
  %246 = vrot.lane.b32.xlu0 %v245, 64
  %v247 = vpop.permute.xlu0 %246
  %vm248 = vcmask 785920
  %s249 = scalar_lea.vmem %s1, 24
  %250 = vst.msk [vmem:[%s249] sm:$0xff] %vm248, %v247
  %s251 = scalar_lea.vmem %s0, 198
  %v252 = vld [vmem:[%s251] ss:$8 sm:$0xf]
  %s253 = scalar_lea.vmem %s0, 198
  %v254 = vld [vmem:[%s253] ss:$8 sm:$0xf0]
  %vm255 = vcmask 1047556
  %v256 = vsel %vm255, %v254, %v252
  %257 = vrot.lane.b32.xlu0 %v256, 64
  %v258 = vpop.permute.xlu0 %257
  %vm259 = vcmask 785920
  %s260 = scalar_lea.vmem %s1, 56
  %261 = vst.msk [vmem:[%s260] sm:$0xff] %vm259, %v258
  %s262 = scalar_lea.vmem %s0, 1
  %v263 = vld [vmem:[%s262] ss:$8 sm:$0xf]
  %s264 = scalar_lea.vmem %s0, 1
  %v265 = vld [vmem:[%s264] ss:$8 sm:$0xf0]
  %vm266 = vcmask 1047556
  %v267 = vsel %vm266, %v265, %v263
  %268 = vrot.lane.b32.xlu0 %v267, 32
  %v269 = vpop.permute.xlu0 %268
  %vm270 = vcmask 523520
  %271 = vst.msk [vmem:[%s1] sm:$0xff] %vm270, %v269
  %s272 = scalar_lea.vmem %s0, 129
  %v273 = vld [vmem:[%s272] ss:$8 sm:$0xf]
  %s274 = scalar_lea.vmem %s0, 129
  %v275 = vld [vmem:[%s274] ss:$8 sm:$0xf0]
  %vm276 = vcmask 1047556
  %v277 = vsel %vm276, %v275, %v273
  %278 = vrot.lane.b32.xlu0 %v277, 32
  %v279 = vpop.permute.xlu0 %278
  %vm280 = vcmask 523520
  %s281 = scalar_lea.vmem %s1, 32
  %282 = vst.msk [vmem:[%s281] sm:$0xff] %vm280, %v279
  %s283 = scalar_lea.vmem %s0, 5
  %v284 = vld [vmem:[%s283] ss:$8 sm:$0xf]
  %s285 = scalar_lea.vmem %s0, 5
  %v286 = vld [vmem:[%s285] ss:$8 sm:$0xf0]
  %vm287 = vcmask 1047556
  %v288 = vsel %vm287, %v286, %v284
  %289 = vrot.lane.b32.xlu0 %v288, 32
  %v290 = vpop.permute.xlu0 %289
  %vm291 = vcmask 523520
  %s292 = scalar_lea.vmem %s1, 8
  %293 = vst.msk [vmem:[%s292] sm:$0xff] %vm291, %v290
  %s294 = scalar_lea.vmem %s0, 133
  %v295 = vld [vmem:[%s294] ss:$8 sm:$0xf]
  %s296 = scalar_lea.vmem %s0, 133
  %v297 = vld [vmem:[%s296] ss:$8 sm:$0xf0]
  %vm298 = vcmask 1047556
  %v299 = vsel %vm298, %v297, %v295
  %300 = vrot.lane.b32.xlu0 %v299, 32
  %v301 = vpop.permute.xlu0 %300
  %vm302 = vcmask 523520
  %s303 = scalar_lea.vmem %s1, 40
  %304 = vst.msk [vmem:[%s303] sm:$0xff] %vm302, %v301
  %s305 = scalar_lea.vmem %s0, 65
  %v306 = vld [vmem:[%s305] ss:$8 sm:$0xf]
  %s307 = scalar_lea.vmem %s0, 65
  %v308 = vld [vmem:[%s307] ss:$8 sm:$0xf0]
  %vm309 = vcmask 1047556
  %v310 = vsel %vm309, %v308, %v306
  %311 = vrot.lane.b32.xlu0 %v310, 32
  %v312 = vpop.permute.xlu0 %311
  %vm313 = vcmask 523520
  %s314 = scalar_lea.vmem %s1, 16
  %315 = vst.msk [vmem:[%s314] sm:$0xff] %vm313, %v312
  %s316 = scalar_lea.vmem %s0, 193
  %v317 = vld [vmem:[%s316] ss:$8 sm:$0xf]
  %s318 = scalar_lea.vmem %s0, 193
  %v319 = vld [vmem:[%s318] ss:$8 sm:$0xf0]
  %vm320 = vcmask 1047556
  %v321 = vsel %vm320, %v319, %v317
  %322 = vrot.lane.b32.xlu0 %v321, 32
  %v323 = vpop.permute.xlu0 %322
  %vm324 = vcmask 523520
  %s325 = scalar_lea.vmem %s1, 48
  %326 = vst.msk [vmem:[%s325] sm:$0xff] %vm324, %v323
  %s327 = scalar_lea.vmem %s0, 69
  %v328 = vld [vmem:[%s327] ss:$8 sm:$0xf]
  %s329 = scalar_lea.vmem %s0, 69
  %v330 = vld [vmem:[%s329] ss:$8 sm:$0xf0]
  %vm331 = vcmask 1047556
  %v332 = vsel %vm331, %v330, %v328
  %333 = vrot.lane.b32.xlu0 %v332, 32
  %v334 = vpop.permute.xlu0 %333
  %vm335 = vcmask 523520
  %s336 = scalar_lea.vmem %s1, 24
  %337 = vst.msk [vmem:[%s336] sm:$0xff] %vm335, %v334
  %s338 = scalar_lea.vmem %s0, 197
  %v339 = vld [vmem:[%s338] ss:$8 sm:$0xf]
  %s340 = scalar_lea.vmem %s0, 197
  %v341 = vld [vmem:[%s340] ss:$8 sm:$0xf0]
  %vm342 = vcmask 1047556
  %v343 = vsel %vm342, %v341, %v339
  %344 = vrot.lane.b32.xlu0 %v343, 32
  %v345 = vpop.permute.xlu0 %344
  %vm346 = vcmask 523520
  %s347 = scalar_lea.vmem %s1, 56
  %348 = vst.msk [vmem:[%s347] sm:$0xff] %vm346, %v345

// kernel: res_block_forward.1
$region0: #{res_block_forward.1}
  #allocation0 [shape = 'u32[]', space=smem, size = 0x4, offset = 0x4, fixed_abs, tag = 'smem constant byte address 0x4 - core index']
  #allocation1 [shape = 'u32[144,128]{1,0:T(1,128)}', space=vmem, size = 0x12000, scoped, tag = 'internal scratch']
  #allocation2 [shape = 'f32[20,256]{1,0:T(8,128)}', space=vmem, size = 0x6000, scoped, tag = 'scratch operand']
  %s0 = inlined_call_operand.vmem [shape: f32[20,256], index: 0, kind: input, shape index: {}]
  %s1 = inlined_call_operand.vmem [shape: bf16[3,256,256], index: 1, kind: input, shape index: {}]
  %s2 = inlined_call_operand.vmem [shape: bf16[3,256,256], index: 2, kind: input, shape index: {}]
  %s3 = inlined_call_operand.vmem [shape: f32[1,32], index: 3, kind: input, shape index: {}]
  %s4 = inlined_call_operand.vmem [shape: f32[1,32], index: 4, kind: input, shape index: {}]
  %s5 = inlined_call_operand.vmem [shape: f32[1,32], index: 5, kind: input, shape index: {}]
  %s6 = inlined_call_operand.vmem [shape: f32[1,32], index: 6, kind: input, shape index: {}]
  %s7 = inlined_call_operand.vmem [shape: f32[256,32], index: 7, kind: input, shape index: {}]
  %s8 = inlined_call_operand.vmem [shape: f32[32,256], index: 8, kind: input, shape index: {}]
  %s9 = inlined_call_operand.vmem [shape: f32[16,256], index: 9, kind: output, shape index: {}]
  %s10 = sld [smem:[#allocation0]]
  $region46: #{res_block_forward.1} parent=0
    _
  %s12 = ssub.s32 1, %s10
  %s13 = scalar_select 0, %s12, %s10
  // Predicated region
  $region2: #{res_block_forward.1} parent=0 // pred_check
    _
  $region3: #{res_block_forward.1} parent=0 // pred_check_branch
    %15 = sbr.rel (0) target = $region5
  $region4: #{res_block_forward.1} parent=0 // pred_region
    _
  $region5: #{res_block_forward.1} parent=0 // pred_fallthru
    _
  // Predicated region
  $region6: #{res_block_forward.1} parent=0 // pred_check
    _
  $region7: #{res_block_forward.1} parent=0 // pred_check_branch
    %17 = sbr.rel (0) target = $region9
  $region8: #{res_block_forward.1} parent=0 // pred_region
    _
  $region9: #{res_block_forward.1} parent=0 // pred_fallthru
    _
  // Predicated region
  $region10: #{res_block_forward.1} parent=0 // pred_check
    _
  $region11: #{res_block_forward.1} parent=0 // pred_check_branch
    %19 = sbr.rel (0) target = $region13
  $region12: #{res_block_forward.1} parent=0 // pred_region
    _
  $region13: #{res_block_forward.1} parent=0 // pred_fallthru
    _
  // Predicated region
  $region14: #{res_block_forward.1} parent=0 // pred_check
    _
  $region15: #{res_block_forward.1} parent=0 // pred_check_branch
    %21 = sbr.rel (0) target = $region17
  $region16: #{res_block_forward.1} parent=0 // pred_region
    _
  $region17: #{res_block_forward.1} parent=0 // pred_fallthru
    _
  // Predicated region
  $region18: #{res_block_forward.1} parent=0 // pred_check
    _
  $region19: #{res_block_forward.1} parent=0 // pred_check_branch
    %23 = sbr.rel (0) target = $region21
  $region20: #{res_block_forward.1} parent=0 // pred_region
    _
  $region21: #{res_block_forward.1} parent=0 // pred_fallthru
    _
  // Predicated region
  $region22: #{res_block_forward.1} parent=0 // pred_check
    _
  $region23: #{res_block_forward.1} parent=0 // pred_check_branch
    %25 = sbr.rel (0) target = $region25
  $region24: #{res_block_forward.1} parent=0 // pred_region
    _
  $region25: #{res_block_forward.1} parent=0 // pred_fallthru
    _
  // Predicated region
  $region26: #{res_block_forward.1} parent=0 // pred_check
    _
  $region27: #{res_block_forward.1} parent=0 // pred_check_branch
    %27 = sbr.rel (0) target = $region29
  $region28: #{res_block_forward.1} parent=0 // pred_region
    _
  $region29: #{res_block_forward.1} parent=0 // pred_fallthru
    _
  // Predicated region
  $region30: #{res_block_forward.1} parent=0 // pred_check
    _
  $region31: #{res_block_forward.1} parent=0 // pred_check_branch
    %29 = sbr.rel (0) target = $region33
  $region32: #{res_block_forward.1} parent=0 // pred_region
    _
  $region33: #{res_block_forward.1} parent=0 // pred_fallthru
    _
  // Predicated region
  $region34: #{res_block_forward.1} parent=0 // pred_check
    _
  $region35: #{res_block_forward.1} parent=0 // pred_check_branch
    %31 = sbr.rel (0) target = $region37
  $region36: #{res_block_forward.1} parent=0 // pred_region
    _
  $region37: #{res_block_forward.1} parent=0 // pred_fallthru
    _
  %v32 = vld [vmem:[%s0] sm:$0xff]
  %v33 = vld [vmem:[%s0 + $0x8] sm:$0xff]
  %v34 = vld [vmem:[%s0 + $0x10] sm:$0xfc]
  %v35 = vld [vmem:[%s0 + $0x18] sm:$0xfc]
  %v36 = vld [vmem:[%s0 + $0x20] sm:$0x3]
  %v37 = vld [vmem:[%s0 + $0x28] sm:$0x3]
  %vm42 = vcmask 1045504
  %v43 = vrot.slane %v34, 2
  %v44 = vrot.slane %v36, 2
  %v45 = vsel %vm42, %v43, %v44
  %v46 = vrot.slane %v35, 2
  %v47 = vrot.slane %v37, 2
  %v48 = vsel %vm42, %v46, %v47
  %v51 = vpack.c.bf16 %v45, %v32
  %v52 = vpack.c.bf16 %v48, %v33
  %v53 = vld [vmem:[%s1] sm:$0xff]
  %v54 = vld [vmem:[%s1 + $0x8] sm:$0xff]
  %v55 = vld [vmem:[%s1 + $0x10] sm:$0xff]
  %v56 = vld [vmem:[%s1 + $0x18] sm:$0xff]
  %v57 = vld [vmem:[%s1 + $0x20] sm:$0xff]
  %v58 = vld [vmem:[%s1 + $0x28] sm:$0xff]
  %v59 = vld [vmem:[%s1 + $0x30] sm:$0xff]
  %v60 = vld [vmem:[%s1 + $0x38] sm:$0xff]
  %v61 = vld [vmem:[%s1 + $0x40] sm:$0xff]
  %v62 = vld [vmem:[%s1 + $0x48] sm:$0xff]
  %v63 = vld [vmem:[%s1 + $0x50] sm:$0xff]
  %v64 = vld [vmem:[%s1 + $0x58] sm:$0xff]
  %v65 = vld [vmem:[%s1 + $0x60] sm:$0xff]
  %v66 = vld [vmem:[%s1 + $0x68] sm:$0xff]
  %v67 = vld [vmem:[%s1 + $0x70] sm:$0xff]
  %v68 = vld [vmem:[%s1 + $0x78] sm:$0xff]
  %v69 = vld [vmem:[%s1 + $0x80] sm:$0xff]
  %v70 = vld [vmem:[%s1 + $0x88] sm:$0xff]
  %v71 = vld [vmem:[%s1 + $0x90] sm:$0xff]
  %v72 = vld [vmem:[%s1 + $0x98] sm:$0xff]
  %v73 = vld [vmem:[%s1 + $0xa0] sm:$0xff]
  %v74 = vld [vmem:[%s1 + $0xa8] sm:$0xff]
  %v75 = vld [vmem:[%s1 + $0xb0] sm:$0xff]
  %v76 = vld [vmem:[%s1 + $0xb8] sm:$0xff]
  %v77 = vld [vmem:[%s1 + $0xc0] sm:$0xff]
  %v78 = vld [vmem:[%s1 + $0xc8] sm:$0xff]
  %v79 = vld [vmem:[%s1 + $0xd0] sm:$0xff]
  %v80 = vld [vmem:[%s1 + $0xd8] sm:$0xff]
  %v81 = vld [vmem:[%s1 + $0xe0] sm:$0xff]
  %v82 = vld [vmem:[%s1 + $0xe8] sm:$0xff]
  %v83 = vld [vmem:[%s1 + $0xf0] sm:$0xff]
  %v84 = vld [vmem:[%s1 + $0xf8] sm:$0xff]
  %v85 = vld [vmem:[%s0] sm:$0xfe]
  %v86 = vld [vmem:[%s0 + $0x8] sm:$0xfe]
  %v87 = vld [vmem:[%s0 + $0x10] sm:$0x1]
  %v88 = vld [vmem:[%s0 + $0x18] sm:$0x1]
  %v89 = vld [vmem:[%s0 + $0x10] sm:$0xf8]
  %v90 = vld [vmem:[%s0 + $0x18] sm:$0xf8]
  %v91 = vld [vmem:[%s0 + $0x20] sm:$0x7]
  %v92 = vld [vmem:[%s0 + $0x28] sm:$0x7]
  %vm97 = vcmask 1046528
  %v98 = vrot.slane %v85, 1
  %v99 = vrot.slane %v87, 1
  %v100 = vsel %vm97, %v98, %v99
  %v101 = vrot.slane %v86, 1
  %v102 = vrot.slane %v88, 1
  %v103 = vsel %vm97, %v101, %v102
  %vm110 = vcmask 1044480
  %v111 = vrot.slane %v89, 3
  %v112 = vrot.slane %v91, 3
  %v113 = vsel %vm110, %v111, %v112
  %v114 = vrot.slane %v90, 3
  %v115 = vrot.slane %v92, 3
  %v116 = vsel %vm110, %v114, %v115
  %v119 = vpack.c.bf16 %v113, %v100
  %v120 = vpack.c.bf16 %v116, %v103
  %s121 = scalar_lea.vmem %s1, 256
  %v122 = vld [vmem:[%s121] sm:$0xff]
  %v123 = vld [vmem:[%s121 + $0x8] sm:$0xff]
  %v124 = vld [vmem:[%s121 + $0x10] sm:$0xff]
  %v125 = vld [vmem:[%s121 + $0x18] sm:$0xff]
  %v126 = vld [vmem:[%s121 + $0x20] sm:$0xff]
  %v127 = vld [vmem:[%s121 + $0x28] sm:$0xff]
  %v128 = vld [vmem:[%s121 + $0x30] sm:$0xff]
  %v129 = vld [vmem:[%s121 + $0x38] sm:$0xff]
  %v130 = vld [vmem:[%s121 + $0x40] sm:$0xff]
  %v131 = vld [vmem:[%s121 + $0x48] sm:$0xff]
  %v132 = vld [vmem:[%s121 + $0x50] sm:$0xff]
  %v133 = vld [vmem:[%s121 + $0x58] sm:$0xff]
  %v134 = vld [vmem:[%s121 + $0x60] sm:$0xff]
  %v135 = vld [vmem:[%s121 + $0x68] sm:$0xff]
  %v136 = vld [vmem:[%s121 + $0x70] sm:$0xff]
  %v137 = vld [vmem:[%s121 + $0x78] sm:$0xff]
  %v138 = vld [vmem:[%s121 + $0x80] sm:$0xff]
  %v139 = vld [vmem:[%s121 + $0x88] sm:$0xff]
  %v140 = vld [vmem:[%s121 + $0x90] sm:$0xff]
  %v141 = vld [vmem:[%s121 + $0x98] sm:$0xff]
  %v142 = vld [vmem:[%s121 + $0xa0] sm:$0xff]
  %v143 = vld [vmem:[%s121 + $0xa8] sm:$0xff]
  %v144 = vld [vmem:[%s121 + $0xb0] sm:$0xff]
  %v145 = vld [vmem:[%s121 + $0xb8] sm:$0xff]
  %v146 = vld [vmem:[%s121 + $0xc0] sm:$0xff]
  %v147 = vld [vmem:[%s121 + $0xc8] sm:$0xff]
  %v148 = vld [vmem:[%s121 + $0xd0] sm:$0xff]
  %v149 = vld [vmem:[%s121 + $0xd8] sm:$0xff]
  %v150 = vld [vmem:[%s121 + $0xe0] sm:$0xff]
  %v151 = vld [vmem:[%s121 + $0xe8] sm:$0xff]
  %v152 = vld [vmem:[%s121 + $0xf0] sm:$0xff]
  %v153 = vld [vmem:[%s121 + $0xf8] sm:$0xff]
  %v186 = vunpack.c.l.b16 %v122
  %v187 = vunpack.c.h.b16 %v122
  %v188 = vunpack.c.l.b16 %v123
  %v189 = vunpack.c.h.b16 %v123
  %v190 = vunpack.c.l.b16 %v124
  %v191 = vunpack.c.h.b16 %v124
  %v192 = vunpack.c.l.b16 %v125
  %v193 = vunpack.c.h.b16 %v125
  %v194 = vunpack.c.l.b16 %v126
  %v195 = vunpack.c.h.b16 %v126
  %v196 = vunpack.c.l.b16 %v127
  %v197 = vunpack.c.h.b16 %v127
  %v198 = vunpack.c.l.b16 %v128
  %v199 = vunpack.c.h.b16 %v128
  %v200 = vunpack.c.l.b16 %v129
  %v201 = vunpack.c.h.b16 %v129
  %v202 = vunpack.c.l.b16 %v130
  %v203 = vunpack.c.h.b16 %v130
  %v204 = vunpack.c.l.b16 %v131
  %v205 = vunpack.c.h.b16 %v131
  %v206 = vunpack.c.l.b16 %v132
  %v207 = vunpack.c.h.b16 %v132
  %v208 = vunpack.c.l.b16 %v133
  %v209 = vunpack.c.h.b16 %v133
  %v210 = vunpack.c.l.b16 %v134
  %v211 = vunpack.c.h.b16 %v134
  %v212 = vunpack.c.l.b16 %v135
  %v213 = vunpack.c.h.b16 %v135
  %v214 = vunpack.c.l.b16 %v136
  %v215 = vunpack.c.h.b16 %v136
  %v216 = vunpack.c.l.b16 %v137
  %v217 = vunpack.c.h.b16 %v137
  %v218 = vunpack.c.l.b16 %v138
  %v219 = vunpack.c.h.b16 %v138
  %v220 = vunpack.c.l.b16 %v139
  %v221 = vunpack.c.h.b16 %v139
  %v222 = vunpack.c.l.b16 %v140
  %v223 = vunpack.c.h.b16 %v140
  %v224 = vunpack.c.l.b16 %v141
  %v225 = vunpack.c.h.b16 %v141
  %v226 = vunpack.c.l.b16 %v142
  %v227 = vunpack.c.h.b16 %v142
  %v228 = vunpack.c.l.b16 %v143
  %v229 = vunpack.c.h.b16 %v143
  %v230 = vunpack.c.l.b16 %v144
  %v231 = vunpack.c.h.b16 %v144
  %v232 = vunpack.c.l.b16 %v145
  %v233 = vunpack.c.h.b16 %v145
  %v234 = vunpack.c.l.b16 %v146
  %v235 = vunpack.c.h.b16 %v146
  %v236 = vunpack.c.l.b16 %v147
  %v237 = vunpack.c.h.b16 %v147
  %v238 = vunpack.c.l.b16 %v148
  %v239 = vunpack.c.h.b16 %v148
  %v240 = vunpack.c.l.b16 %v149
  %v241 = vunpack.c.h.b16 %v149
  %v242 = vunpack.c.l.b16 %v150
  %v243 = vunpack.c.h.b16 %v150
  %v244 = vunpack.c.l.b16 %v151
  %v245 = vunpack.c.h.b16 %v151
  %v246 = vunpack.c.l.b16 %v152
  %v247 = vunpack.c.h.b16 %v152
  %v248 = vunpack.c.l.b16 %v153
  %v249 = vunpack.c.h.b16 %v153
  %v250 = vpack.c.b16 %v188, %v186
  %v251 = vpack.c.b16 %v189, %v187
  %v252 = vpack.c.b16 %v192, %v190
  %v253 = vpack.c.b16 %v193, %v191
  %v254 = vpack.c.b16 %v196, %v194
  %v255 = vpack.c.b16 %v197, %v195
  %v256 = vpack.c.b16 %v200, %v198
  %v257 = vpack.c.b16 %v201, %v199
  %v258 = vpack.c.b16 %v204, %v202
  %v259 = vpack.c.b16 %v205, %v203
  %v260 = vpack.c.b16 %v208, %v206
  %v261 = vpack.c.b16 %v209, %v207
  %v262 = vpack.c.b16 %v212, %v210
  %v263 = vpack.c.b16 %v213, %v211
  %v264 = vpack.c.b16 %v216, %v214
  %v265 = vpack.c.b16 %v217, %v215
  %v266 = vpack.c.b16 %v220, %v218
  %v267 = vpack.c.b16 %v221, %v219
  %v268 = vpack.c.b16 %v224, %v222
  %v269 = vpack.c.b16 %v225, %v223
  %v270 = vpack.c.b16 %v228, %v226
  %v271 = vpack.c.b16 %v229, %v227
  %v272 = vpack.c.b16 %v232, %v230
  %v273 = vpack.c.b16 %v233, %v231
  %v274 = vpack.c.b16 %v236, %v234
  %v275 = vpack.c.b16 %v237, %v235
  %v276 = vpack.c.b16 %v240, %v238
  %v277 = vpack.c.b16 %v241, %v239
  %v278 = vpack.c.b16 %v244, %v242
  %v279 = vpack.c.b16 %v245, %v243
  %v280 = vpack.c.b16 %v248, %v246
  %v281 = vpack.c.b16 %v249, %v247
  %314 = vmatprep.subr.bf16.mxu0 %v265
  %315 = vmatpush1.bf16.msra.mxu0 %v264
  %316 = vmatprep.subr.bf16.mxu0 %v263
  %317 = vmatpush1.bf16.msra.mxu0 %v262
  %318 = vmatprep.subr.bf16.mxu0 %v261
  %319 = vmatpush1.bf16.msra.mxu0 %v260
  %320 = vmatprep.subr.bf16.mxu0 %v259
  %321 = vmatpush1.bf16.msra.mxu0 %v258
  %322 = vmatprep.subr.bf16.mxu0 %v257
  %323 = vmatpush1.bf16.msra.mxu0 %v256
  %324 = vmatprep.subr.bf16.mxu0 %v255
  %325 = vmatpush1.bf16.msra.mxu0 %v254
  %326 = vmatprep.subr.bf16.mxu0 %v253
  %327 = vmatpush1.bf16.msra.mxu0 %v252
  %328 = vmatprep.subr.bf16.mxu0 %v251
  %329 = vmatpush1.bf16.msra.mxu0 %v250
  %330 = vmatprep.subr.bf16.mxu0 %v281
  %331 = vmatpush2.bf16.msra.mxu0 %v280
  %332 = vmatprep.subr.bf16.mxu0 %v279
  %333 = vmatpush2.bf16.msra.mxu0 %v278
  %334 = vmatprep.subr.bf16.mxu0 %v277
  %335 = vmatpush2.bf16.msra.mxu0 %v276
  %336 = vmatprep.subr.bf16.mxu0 %v275
  %337 = vmatpush2.bf16.msra.mxu0 %v274
  %338 = vmatprep.subr.bf16.mxu0 %v273
  %339 = vmatpush2.bf16.msra.mxu0 %v272
  %340 = vmatprep.subr.bf16.mxu0 %v271
  %341 = vmatpush2.bf16.msra.mxu0 %v270
  %342 = vmatprep.subr.bf16.mxu0 %v269
  %343 = vmatpush2.bf16.msra.mxu0 %v268
  %344 = vmatprep.subr.bf16.mxu0 %v267
  %345 = vmatpush2.bf16.msra.mxu0 %v266
  %346 = vmatprep.mubr.bf16.mxu0 %v120
  %347 = vmatmul.mubr.bf16.gmra.mxu0 %v119
  %v348 = vpop.f32.mrf.mxu0
  %v349 = vadd.f32 0.0, %v348
  %v350 = vpop.f32.mrf.mxu0
  %v351 = vadd.f32 0.0, %v350
  %v352 = vpop.f32.mrf.mxu0
  %v353 = vadd.f32 0.0, %v352
  %v354 = vpop.f32.mrf.mxu0
  %v355 = vadd.f32 0.0, %v354
  %356 = vdwg.mxu0
  %v389 = vunpack.c.l.b16 %v53
  %v390 = vunpack.c.h.b16 %v53
  %v391 = vunpack.c.l.b16 %v54
  %v392 = vunpack.c.h.b16 %v54
  %v393 = vunpack.c.l.b16 %v55
  %v394 = vunpack.c.h.b16 %v55
  %v395 = vunpack.c.l.b16 %v56
  %v396 = vunpack.c.h.b16 %v56
  %v397 = vunpack.c.l.b16 %v57
  %v398 = vunpack.c.h.b16 %v57
  %v399 = vunpack.c.l.b16 %v58
  %v400 = vunpack.c.h.b16 %v58
  %v401 = vunpack.c.l.b16 %v59
  %v402 = vunpack.c.h.b16 %v59
  %v403 = vunpack.c.l.b16 %v60
  %v404 = vunpack.c.h.b16 %v60
  %v405 = vunpack.c.l.b16 %v61
  %v406 = vunpack.c.h.b16 %v61
  %v407 = vunpack.c.l.b16 %v62
  %v408 = vunpack.c.h.b16 %v62
  %v409 = vunpack.c.l.b16 %v63
  %v410 = vunpack.c.h.b16 %v63
  %v411 = vunpack.c.l.b16 %v64
  %v412 = vunpack.c.h.b16 %v64
  %v413 = vunpack.c.l.b16 %v65
  %v414 = vunpack.c.h.b16 %v65
  %v415 = vunpack.c.l.b16 %v66
  %v416 = vunpack.c.h.b16 %v66
  %v417 = vunpack.c.l.b16 %v67
  %v418 = vunpack.c.h.b16 %v67
  %v419 = vunpack.c.l.b16 %v68
  %v420 = vunpack.c.h.b16 %v68
  %v421 = vunpack.c.l.b16 %v69
  %v422 = vunpack.c.h.b16 %v69
  %v423 = vunpack.c.l.b16 %v70
  %v424 = vunpack.c.h.b16 %v70
  %v425 = vunpack.c.l.b16 %v71
  %v426 = vunpack.c.h.b16 %v71
  %v427 = vunpack.c.l.b16 %v72
  %v428 = vunpack.c.h.b16 %v72
  %v429 = vunpack.c.l.b16 %v73
  %v430 = vunpack.c.h.b16 %v73
  %v431 = vunpack.c.l.b16 %v74
  %v432 = vunpack.c.h.b16 %v74
  %v433 = vunpack.c.l.b16 %v75
  %v434 = vunpack.c.h.b16 %v75
  %v435 = vunpack.c.l.b16 %v76
  %v436 = vunpack.c.h.b16 %v76
  %v437 = vunpack.c.l.b16 %v77
  %v438 = vunpack.c.h.b16 %v77
  %v439 = vunpack.c.l.b16 %v78
  %v440 = vunpack.c.h.b16 %v78
  %v441 = vunpack.c.l.b16 %v79
  %v442 = vunpack.c.h.b16 %v79
  %v443 = vunpack.c.l.b16 %v80
  %v444 = vunpack.c.h.b16 %v80
  %v445 = vunpack.c.l.b16 %v81
  %v446 = vunpack.c.h.b16 %v81
  %v447 = vunpack.c.l.b16 %v82
  %v448 = vunpack.c.h.b16 %v82
  %v449 = vunpack.c.l.b16 %v83
  %v450 = vunpack.c.h.b16 %v83
  %v451 = vunpack.c.l.b16 %v84
  %v452 = vunpack.c.h.b16 %v84
  %v453 = vpack.c.b16 %v391, %v389
  %v454 = vpack.c.b16 %v392, %v390
  %v455 = vpack.c.b16 %v395, %v393
  %v456 = vpack.c.b16 %v396, %v394
  %v457 = vpack.c.b16 %v399, %v397
  %v458 = vpack.c.b16 %v400, %v398
  %v459 = vpack.c.b16 %v403, %v401
  %v460 = vpack.c.b16 %v404, %v402
  %v461 = vpack.c.b16 %v407, %v405
  %v462 = vpack.c.b16 %v408, %v406
  %v463 = vpack.c.b16 %v411, %v409
  %v464 = vpack.c.b16 %v412, %v410
  %v465 = vpack.c.b16 %v415, %v413
  %v466 = vpack.c.b16 %v416, %v414
  %v467 = vpack.c.b16 %v419, %v417
  %v468 = vpack.c.b16 %v420, %v418
  %v469 = vpack.c.b16 %v423, %v421
  %v470 = vpack.c.b16 %v424, %v422
  %v471 = vpack.c.b16 %v427, %v425
  %v472 = vpack.c.b16 %v428, %v426
  %v473 = vpack.c.b16 %v431, %v429
  %v474 = vpack.c.b16 %v432, %v430
  %v475 = vpack.c.b16 %v435, %v433
  %v476 = vpack.c.b16 %v436, %v434
  %v477 = vpack.c.b16 %v439, %v437
  %v478 = vpack.c.b16 %v440, %v438
  %v479 = vpack.c.b16 %v443, %v441
  %v480 = vpack.c.b16 %v444, %v442
  %v481 = vpack.c.b16 %v447, %v445
  %v482 = vpack.c.b16 %v448, %v446
  %v483 = vpack.c.b16 %v451, %v449
  %v484 = vpack.c.b16 %v452, %v450
  %517 = vmatprep.subr.bf16.mxu0 %v468
  %518 = vmatpush1.bf16.msra.mxu0 %v467
  %519 = vmatprep.subr.bf16.mxu0 %v466
  %520 = vmatpush1.bf16.msra.mxu0 %v465
  %521 = vmatprep.subr.bf16.mxu0 %v464
  %522 = vmatpush1.bf16.msra.mxu0 %v463
  %523 = vmatprep.subr.bf16.mxu0 %v462
  %524 = vmatpush1.bf16.msra.mxu0 %v461
  %525 = vmatprep.subr.bf16.mxu0 %v460
  %526 = vmatpush1.bf16.msra.mxu0 %v459
  %527 = vmatprep.subr.bf16.mxu0 %v458
  %528 = vmatpush1.bf16.msra.mxu0 %v457
  %529 = vmatprep.subr.bf16.mxu0 %v456
  %530 = vmatpush1.bf16.msra.mxu0 %v455
  %531 = vmatprep.subr.bf16.mxu0 %v454
  %532 = vmatpush1.bf16.msra.mxu0 %v453
  %533 = vmatprep.subr.bf16.mxu0 %v484
  %534 = vmatpush2.bf16.msra.mxu0 %v483
  %535 = vmatprep.subr.bf16.mxu0 %v482
  %536 = vmatpush2.bf16.msra.mxu0 %v481
  %537 = vmatprep.subr.bf16.mxu0 %v480
  %538 = vmatpush2.bf16.msra.mxu0 %v479
  %539 = vmatprep.subr.bf16.mxu0 %v478
  %540 = vmatpush2.bf16.msra.mxu0 %v477
  %541 = vmatprep.subr.bf16.mxu0 %v476
  %542 = vmatpush2.bf16.msra.mxu0 %v475
  %543 = vmatprep.subr.bf16.mxu0 %v474
  %544 = vmatpush2.bf16.msra.mxu0 %v473
  %545 = vmatprep.subr.bf16.mxu0 %v472
  %546 = vmatpush2.bf16.msra.mxu0 %v471
  %547 = vmatprep.subr.bf16.mxu0 %v470
  %548 = vmatpush2.bf16.msra.mxu0 %v469
  %549 = vmatprep.mubr.bf16.mxu0 %v52
  %550 = vmatmul.mubr.bf16.gmra.mxu0 %v51
  %v551 = vpop.f32.mrf.mxu0
  %v552 = vadd.f32 %v349, %v551
  %v553 = vpop.f32.mrf.mxu0
  %v554 = vadd.f32 %v351, %v553
  %v555 = vpop.f32.mrf.mxu0
  %v556 = vadd.f32 %v353, %v555
  %v557 = vpop.f32.mrf.mxu0
  %v558 = vadd.f32 %v355, %v557
  %559 = vdwg.mxu0
  %v560 = vld [vmem:[%s0] sm:$0xfc]
  %v561 = vld [vmem:[%s0 + $0x8] sm:$0xfc]
  %v562 = vld [vmem:[%s0 + $0x10] sm:$0x3]
  %v563 = vld [vmem:[%s0 + $0x18] sm:$0x3]
  %v564 = vld [vmem:[%s0 + $0x10] sm:$0xf0]
  %v565 = vld [vmem:[%s0 + $0x18] sm:$0xf0]
  %v566 = vld [vmem:[%s0 + $0x20] sm:$0xf]
  %v567 = vld [vmem:[%s0 + $0x28] sm:$0xf]
  %v572 = vrot.slane %v560, 2
  %v573 = vrot.slane %v562, 2
  %v574 = vsel %vm42, %v572, %v573
  %v575 = vrot.slane %v561, 2
  %v576 = vrot.slane %v563, 2
  %v577 = vsel %vm42, %v575, %v576
  %vm584 = vcmask 1043456
  %v585 = vrot.slane %v564, 4
  %v586 = vrot.slane %v566, 4
  %v587 = vsel %vm584, %v585, %v586
  %v588 = vrot.slane %v565, 4
  %v589 = vrot.slane %v567, 4
  %v590 = vsel %vm584, %v588, %v589
  %v593 = vpack.c.bf16 %v587, %v574
  %v594 = vpack.c.bf16 %v590, %v577
  %s595 = scalar_lea.vmem %s1, 512
  %v596 = vld [vmem:[%s595] sm:$0xff]
  %v597 = vld [vmem:[%s595 + $0x8] sm:$0xff]
  %v598 = vld [vmem:[%s595 + $0x10] sm:$0xff]
  %v599 = vld [vmem:[%s595 + $0x18] sm:$0xff]
  %v600 = vld [vmem:[%s595 + $0x20] sm:$0xff]
  %v601 = vld [vmem:[%s595 + $0x28] sm:$0xff]
  %v602 = vld [vmem:[%s595 + $0x30] sm:$0xff]
  %v603 = vld [vmem:[%s595 + $0x38] sm:$0xff]
  %v604 = vld [vmem:[%s595 + $0x40] sm:$0xff]
  %v605 = vld [vmem:[%s595 + $0x48] sm:$0xff]
  %v606 = vld [vmem:[%s595 + $0x50] sm:$0xff]
  %v607 = vld [vmem:[%s595 + $0x58] sm:$0xff]
  %v608 = vld [vmem:[%s595 + $0x60] sm:$0xff]
  %v609 = vld [vmem:[%s595 + $0x68] sm:$0xff]
  %v610 = vld [vmem:[%s595 + $0x70] sm:$0xff]
  %v611 = vld [vmem:[%s595 + $0x78] sm:$0xff]
  %v612 = vld [vmem:[%s595 + $0x80] sm:$0xff]
  %v613 = vld [vmem:[%s595 + $0x88] sm:$0xff]
  %v614 = vld [vmem:[%s595 + $0x90] sm:$0xff]
  %v615 = vld [vmem:[%s595 + $0x98] sm:$0xff]
  %v616 = vld [vmem:[%s595 + $0xa0] sm:$0xff]
  %v617 = vld [vmem:[%s595 + $0xa8] sm:$0xff]
  %v618 = vld [vmem:[%s595 + $0xb0] sm:$0xff]
  %v619 = vld [vmem:[%s595 + $0xb8] sm:$0xff]
  %v620 = vld [vmem:[%s595 + $0xc0] sm:$0xff]
  %v621 = vld [vmem:[%s595 + $0xc8] sm:$0xff]
  %v622 = vld [vmem:[%s595 + $0xd0] sm:$0xff]
  %v623 = vld [vmem:[%s595 + $0xd8] sm:$0xff]
  %v624 = vld [vmem:[%s595 + $0xe0] sm:$0xff]
  %v625 = vld [vmem:[%s595 + $0xe8] sm:$0xff]
  %v626 = vld [vmem:[%s595 + $0xf0] sm:$0xff]
  %v627 = vld [vmem:[%s595 + $0xf8] sm:$0xff]
  %v660 = vunpack.c.l.b16 %v596
  %v661 = vunpack.c.h.b16 %v596
  %v662 = vunpack.c.l.b16 %v597
  %v663 = vunpack.c.h.b16 %v597
  %v664 = vunpack.c.l.b16 %v598
  %v665 = vunpack.c.h.b16 %v598
  %v666 = vunpack.c.l.b16 %v599
  %v667 = vunpack.c.h.b16 %v599
  %v668 = vunpack.c.l.b16 %v600
  %v669 = vunpack.c.h.b16 %v600
  %v670 = vunpack.c.l.b16 %v601
  %v671 = vunpack.c.h.b16 %v601
  %v672 = vunpack.c.l.b16 %v602
  %v673 = vunpack.c.h.b16 %v602
  %v674 = vunpack.c.l.b16 %v603
  %v675 = vunpack.c.h.b16 %v603
  %v676 = vunpack.c.l.b16 %v604
  %v677 = vunpack.c.h.b16 %v604
  %v678 = vunpack.c.l.b16 %v605
  %v679 = vunpack.c.h.b16 %v605
  %v680 = vunpack.c.l.b16 %v606
  %v681 = vunpack.c.h.b16 %v606
  %v682 = vunpack.c.l.b16 %v607
  %v683 = vunpack.c.h.b16 %v607
  %v684 = vunpack.c.l.b16 %v608
  %v685 = vunpack.c.h.b16 %v608
  %v686 = vunpack.c.l.b16 %v609
  %v687 = vunpack.c.h.b16 %v609
  %v688 = vunpack.c.l.b16 %v610
  %v689 = vunpack.c.h.b16 %v610
  %v690 = vunpack.c.l.b16 %v611
  %v691 = vunpack.c.h.b16 %v611
  %v692 = vunpack.c.l.b16 %v612
  %v693 = vunpack.c.h.b16 %v612
  %v694 = vunpack.c.l.b16 %v613
  %v695 = vunpack.c.h.b16 %v613
  %v696 = vunpack.c.l.b16 %v614
  %v697 = vunpack.c.h.b16 %v614
  %v698 = vunpack.c.l.b16 %v615
  %v699 = vunpack.c.h.b16 %v615
  %v700 = vunpack.c.l.b16 %v616
  %v701 = vunpack.c.h.b16 %v616
  %v702 = vunpack.c.l.b16 %v617
  %v703 = vunpack.c.h.b16 %v617
  %v704 = vunpack.c.l.b16 %v618
  %v705 = vunpack.c.h.b16 %v618
  %v706 = vunpack.c.l.b16 %v619
  %v707 = vunpack.c.h.b16 %v619
  %v708 = vunpack.c.l.b16 %v620
  %v709 = vunpack.c.h.b16 %v620
  %v710 = vunpack.c.l.b16 %v621
  %v711 = vunpack.c.h.b16 %v621
  %v712 = vunpack.c.l.b16 %v622
  %v713 = vunpack.c.h.b16 %v622
  %v714 = vunpack.c.l.b16 %v623
  %v715 = vunpack.c.h.b16 %v623
  %v716 = vunpack.c.l.b16 %v624
  %v717 = vunpack.c.h.b16 %v624
  %v718 = vunpack.c.l.b16 %v625
  %v719 = vunpack.c.h.b16 %v625
  %v720 = vunpack.c.l.b16 %v626
  %v721 = vunpack.c.h.b16 %v626
  %v722 = vunpack.c.l.b16 %v627
  %v723 = vunpack.c.h.b16 %v627
  %v724 = vpack.c.b16 %v662, %v660
  %v725 = vpack.c.b16 %v663, %v661
  %v726 = vpack.c.b16 %v666, %v664
  %v727 = vpack.c.b16 %v667, %v665
  %v728 = vpack.c.b16 %v670, %v668
  %v729 = vpack.c.b16 %v671, %v669
  %v730 = vpack.c.b16 %v674, %v672
  %v731 = vpack.c.b16 %v675, %v673
  %v732 = vpack.c.b16 %v678, %v676
  %v733 = vpack.c.b16 %v679, %v677
  %v734 = vpack.c.b16 %v682, %v680
  %v735 = vpack.c.b16 %v683, %v681
  %v736 = vpack.c.b16 %v686, %v684
  %v737 = vpack.c.b16 %v687, %v685
  %v738 = vpack.c.b16 %v690, %v688
  %v739 = vpack.c.b16 %v691, %v689
  %v740 = vpack.c.b16 %v694, %v692
  %v741 = vpack.c.b16 %v695, %v693
  %v742 = vpack.c.b16 %v698, %v696
  %v743 = vpack.c.b16 %v699, %v697
  %v744 = vpack.c.b16 %v702, %v700
  %v745 = vpack.c.b16 %v703, %v701
  %v746 = vpack.c.b16 %v706, %v704
  %v747 = vpack.c.b16 %v707, %v705
  %v748 = vpack.c.b16 %v710, %v708
  %v749 = vpack.c.b16 %v711, %v709
  %v750 = vpack.c.b16 %v714, %v712
  %v751 = vpack.c.b16 %v715, %v713
  %v752 = vpack.c.b16 %v718, %v716
  %v753 = vpack.c.b16 %v719, %v717
  %v754 = vpack.c.b16 %v722, %v720
  %v755 = vpack.c.b16 %v723, %v721
  %788 = vmatprep.subr.bf16.mxu0 %v739
  %789 = vmatpush1.bf16.msra.mxu0 %v738
  %790 = vmatprep.subr.bf16.mxu0 %v737
  %791 = vmatpush1.bf16.msra.mxu0 %v736
  %792 = vmatprep.subr.bf16.mxu0 %v735
  %793 = vmatpush1.bf16.msra.mxu0 %v734
  %794 = vmatprep.subr.bf16.mxu0 %v733
  %795 = vmatpush1.bf16.msra.mxu0 %v732
  %796 = vmatprep.subr.bf16.mxu0 %v731
  %797 = vmatpush1.bf16.msra.mxu0 %v730
  %798 = vmatprep.subr.bf16.mxu0 %v729
  %799 = vmatpush1.bf16.msra.mxu0 %v728
  %800 = vmatprep.subr.bf16.mxu0 %v727
  %801 = vmatpush1.bf16.msra.mxu0 %v726
  %802 = vmatprep.subr.bf16.mxu0 %v725
  %803 = vmatpush1.bf16.msra.mxu0 %v724
  %804 = vmatprep.subr.bf16.mxu0 %v755
  %805 = vmatpush2.bf16.msra.mxu0 %v754
  %806 = vmatprep.subr.bf16.mxu0 %v753
  %807 = vmatpush2.bf16.msra.mxu0 %v752
  %808 = vmatprep.subr.bf16.mxu0 %v751
  %809 = vmatpush2.bf16.msra.mxu0 %v750
  %810 = vmatprep.subr.bf16.mxu0 %v749
  %811 = vmatpush2.bf16.msra.mxu0 %v748
  %812 = vmatprep.subr.bf16.mxu0 %v747
  %813 = vmatpush2.bf16.msra.mxu0 %v746
  %814 = vmatprep.subr.bf16.mxu0 %v745
  %815 = vmatpush2.bf16.msra.mxu0 %v744
  %816 = vmatprep.subr.bf16.mxu0 %v743
  %817 = vmatpush2.bf16.msra.mxu0 %v742
  %818 = vmatprep.subr.bf16.mxu0 %v741
  %819 = vmatpush2.bf16.msra.mxu0 %v740
  %820 = vmatprep.mubr.bf16.mxu0 %v594
  %821 = vmatmul.mubr.bf16.gmra.mxu0 %v593
  %v822 = vpop.f32.mrf.mxu0
  %v823 = vadd.f32 0.0, %v822
  %v824 = vpop.f32.mrf.mxu0
  %v825 = vadd.f32 0.0, %v824
  %v826 = vpop.f32.mrf.mxu0
  %v827 = vadd.f32 0.0, %v826
  %v828 = vpop.f32.mrf.mxu0
  %v829 = vadd.f32 0.0, %v828
  %830 = vdwg.mxu0
  %v831 = vadd.f32 %v552, %v823
  %v832 = vadd.f32 %v554, %v825
  %v833 = vadd.f32 %v556, %v827
  %v834 = vadd.f32 %v558, %v829
  %v835 = vld [vmem:[%s3] sm:$0x1]
  %v836 = vld [vmem:[%s4] sm:$0x1]
  %v837 = vld [vmem:[%s7] sm:$0xff]
  %v838 = vld [vmem:[%s7 + $0x8] sm:$0xff]
  %v839 = vld [vmem:[%s7 + $0x10] sm:$0xff]
  %v840 = vld [vmem:[%s7 + $0x18] sm:$0xff]
  %v841 = vld [vmem:[%s7 + $0x20] sm:$0xff]
  %v842 = vld [vmem:[%s7 + $0x28] sm:$0xff]
  %v843 = vld [vmem:[%s7 + $0x30] sm:$0xff]
  %v844 = vld [vmem:[%s7 + $0x38] sm:$0xff]
  %v845 = vld [vmem:[%s7 + $0x40] sm:$0xff]
  %v846 = vld [vmem:[%s7 + $0x48] sm:$0xff]
  %v847 = vld [vmem:[%s7 + $0x50] sm:$0xff]
  %v848 = vld [vmem:[%s7 + $0x58] sm:$0xff]
  %v849 = vld [vmem:[%s7 + $0x60] sm:$0xff]
  %v850 = vld [vmem:[%s7 + $0x68] sm:$0xff]
  %v851 = vld [vmem:[%s7 + $0x70] sm:$0xff]
  %v852 = vld [vmem:[%s7 + $0x78] sm:$0xff]
  %v853 = vld [vmem:[%s7 + $0x80] sm:$0xff]
  %v854 = vld [vmem:[%s7 + $0x88] sm:$0xff]
  %v855 = vld [vmem:[%s7 + $0x90] sm:$0xff]
  %v856 = vld [vmem:[%s7 + $0x98] sm:$0xff]
  %v857 = vld [vmem:[%s7 + $0xa0] sm:$0xff]
  %v858 = vld [vmem:[%s7 + $0xa8] sm:$0xff]
  %v859 = vld [vmem:[%s7 + $0xb0] sm:$0xff]
  %v860 = vld [vmem:[%s7 + $0xb8] sm:$0xff]
  %v861 = vld [vmem:[%s7 + $0xc0] sm:$0xff]
  %v862 = vld [vmem:[%s7 + $0xc8] sm:$0xff]
  %v863 = vld [vmem:[%s7 + $0xd0] sm:$0xff]
  %v864 = vld [vmem:[%s7 + $0xd8] sm:$0xff]
  %v865 = vld [vmem:[%s7 + $0xe0] sm:$0xff]
  %v866 = vld [vmem:[%s7 + $0xe8] sm:$0xff]
  %v867 = vld [vmem:[%s7 + $0xf0] sm:$0xff]
  %v868 = vld [vmem:[%s7 + $0xf8] sm:$0xff]
  %v869 = vld [vmem:[%s8] sm:$0xff]
  %v870 = vld [vmem:[%s8 + $0x8] sm:$0xff]
  %v871 = vld [vmem:[%s8 + $0x10] sm:$0xff]
  %v872 = vld [vmem:[%s8 + $0x18] sm:$0xff]
  %v873 = vld [vmem:[%s8 + $0x20] sm:$0xff]
  %v874 = vld [vmem:[%s8 + $0x28] sm:$0xff]
  %v875 = vld [vmem:[%s8 + $0x30] sm:$0xff]
  %v876 = vld [vmem:[%s8 + $0x38] sm:$0xff]
  %v877 = vadd.f32 %v831, %v833
  %v878 = vrot.slane %v877, 4
  %v879 = vadd.f32 %v877, %v878
  %v880 = vrot.slane %v879, 2
  %v881 = vadd.f32 %v879, %v880
  %v882 = vrot.slane %v881, 1
  %v883 = vadd.f32 %v881, %v882
  %v884 = vadd.f32 %v832, %v834
  %v885 = vrot.slane %v884, 4
  %v886 = vadd.f32 %v884, %v885
  %v887 = vrot.slane %v886, 2
  %v888 = vadd.f32 %v886, %v887
  %v889 = vrot.slane %v888, 1
  %v890 = vadd.f32 %v888, %v889
  %v891 = vmul.f32 %v831, %v831
  %v892 = vmul.f32 %v832, %v832
  %v893 = vmul.f32 %v833, %v833
  %v894 = vmul.f32 %v834, %v834
  %v895 = vadd.f32 %v891, %v893
  %v896 = vrot.slane %v895, 4
  %v897 = vadd.f32 %v895, %v896
  %v898 = vrot.slane %v897, 2
  %v899 = vadd.f32 %v897, %v898
  %v900 = vrot.slane %v899, 1
  %v901 = vadd.f32 %v899, %v900
  %v902 = vadd.f32 %v892, %v894
  %v903 = vrot.slane %v902, 4
  %v904 = vadd.f32 %v902, %v903
  %v905 = vrot.slane %v904, 2
  %v906 = vadd.f32 %v904, %v905
  %v907 = vrot.slane %v906, 1
  %v908 = vadd.f32 %v906, %v907
  %909 = vmatprep.subr.mxu0 0.0
  %910 = vmatpush1.msra.mxu0 %v852
  %911 = vmatprep.subr.mxu0 0.0
  %912 = vmatpush1.msra.mxu0 %v851
  %913 = vmatprep.subr.mxu0 0.0
  %914 = vmatpush1.msra.mxu0 %v850
  %915 = vmatprep.subr.mxu0 0.0
  %916 = vmatpush1.msra.mxu0 %v849
  %917 = vmatprep.subr.mxu0 0.0
  %918 = vmatpush1.msra.mxu0 %v848
  %919 = vmatprep.subr.mxu0 0.0
  %920 = vmatpush1.msra.mxu0 %v847
  %921 = vmatprep.subr.mxu0 0.0
  %922 = vmatpush1.msra.mxu0 %v846
  %923 = vmatprep.subr.mxu0 0.0
  %924 = vmatpush1.msra.mxu0 %v845
  %925 = vmatprep.subr.mxu0 0.0
  %926 = vmatpush1.msra.mxu0 %v844
  %927 = vmatprep.subr.mxu0 0.0
  %928 = vmatpush1.msra.mxu0 %v843
  %929 = vmatprep.subr.mxu0 0.0
  %930 = vmatpush1.msra.mxu0 %v842
  %931 = vmatprep.subr.mxu0 0.0
  %932 = vmatpush1.msra.mxu0 %v841
  %933 = vmatprep.subr.mxu0 0.0
  %934 = vmatpush1.msra.mxu0 %v840
  %935 = vmatprep.subr.mxu0 0.0
  %936 = vmatpush1.msra.mxu0 %v839
  %937 = vmatprep.subr.mxu0 0.0
  %938 = vmatpush1.msra.mxu0 %v838
  %939 = vmatprep.subr.mxu0 0.0
  %940 = vmatpush1.msra.mxu0 %v837
  %941 = vmatprep.subr.mxu0 0.0
  %942 = vmatpush2.msra.mxu0 %v868
  %943 = vmatprep.subr.mxu0 0.0
  %944 = vmatpush2.msra.mxu0 %v867
  %945 = vmatprep.subr.mxu0 0.0
  %946 = vmatpush2.msra.mxu0 %v866
  %947 = vmatprep.subr.mxu0 0.0
  %948 = vmatpush2.msra.mxu0 %v865
  %949 = vmatprep.subr.mxu0 0.0
  %950 = vmatpush2.msra.mxu0 %v864
  %951 = vmatprep.subr.mxu0 0.0
  %952 = vmatpush2.msra.mxu0 %v863
  %953 = vmatprep.subr.mxu0 0.0
  %954 = vmatpush2.msra.mxu0 %v862
  %955 = vmatprep.subr.mxu0 0.0
  %956 = vmatpush2.msra.mxu0 %v861
  %957 = vmatprep.subr.mxu0 0.0
  %958 = vmatpush2.msra.mxu0 %v860
  %959 = vmatprep.subr.mxu0 0.0
  %960 = vmatpush2.msra.mxu0 %v859
  %961 = vmatprep.subr.mxu0 0.0
  %962 = vmatpush2.msra.mxu0 %v858
  %963 = vmatprep.subr.mxu0 0.0
  %964 = vmatpush2.msra.mxu0 %v857
  %965 = vmatprep.subr.mxu0 0.0
  %966 = vmatpush2.msra.mxu0 %v856
  %967 = vmatprep.subr.mxu0 0.0
  %968 = vmatpush2.msra.mxu0 %v855
  %969 = vmatprep.subr.mxu0 0.0
  %970 = vmatpush2.msra.mxu0 %v854
  %971 = vmatprep.subr.mxu0 0.0
  %972 = vmatpush2.msra.mxu0 %v853
  %973 = vmatprep.mubr.f32.mxu0 %v890
  %974 = vmatmul.mubr.f32.gmra.mxu0 %v883
  %v975 = vpop.f32.mrf.mxu0
  %v976 = vadd.f32 0.0, %v975
  %v977 = vpop.f32.mrf.mxu0
  %978 = vdwg.mxu0
  %979 = vmatprep.subr.mxu0 0.0
  %980 = vmatpush1.msra.mxu0 %v852
  %981 = vmatprep.subr.mxu0 0.0
  %982 = vmatpush1.msra.mxu0 %v851
  %983 = vmatprep.subr.mxu0 0.0
  %984 = vmatpush1.msra.mxu0 %v850
  %985 = vmatprep.subr.mxu0 0.0
  %986 = vmatpush1.msra.mxu0 %v849
  %987 = vmatprep.subr.mxu0 0.0
  %988 = vmatpush1.msra.mxu0 %v848
  %989 = vmatprep.subr.mxu0 0.0
  %990 = vmatpush1.msra.mxu0 %v847
  %991 = vmatprep.subr.mxu0 0.0
  %992 = vmatpush1.msra.mxu0 %v846
  %993 = vmatprep.subr.mxu0 0.0
  %994 = vmatpush1.msra.mxu0 %v845
  %995 = vmatprep.subr.mxu0 0.0
  %996 = vmatpush1.msra.mxu0 %v844
  %997 = vmatprep.subr.mxu0 0.0
  %998 = vmatpush1.msra.mxu0 %v843
  %999 = vmatprep.subr.mxu0 0.0
  %1000 = vmatpush1.msra.mxu0 %v842
  %1001 = vmatprep.subr.mxu0 0.0
  %1002 = vmatpush1.msra.mxu0 %v841
  %1003 = vmatprep.subr.mxu0 0.0
  %1004 = vmatpush1.msra.mxu0 %v840
  %1005 = vmatprep.subr.mxu0 0.0
  %1006 = vmatpush1.msra.mxu0 %v839
  %1007 = vmatprep.subr.mxu0 0.0
  %1008 = vmatpush1.msra.mxu0 %v838
  %1009 = vmatprep.subr.mxu0 0.0
  %1010 = vmatpush1.msra.mxu0 %v837
  %1011 = vmatprep.subr.mxu0 0.0
  %1012 = vmatpush2.msra.mxu0 %v868
  %1013 = vmatprep.subr.mxu0 0.0
  %1014 = vmatpush2.msra.mxu0 %v867
  %1015 = vmatprep.subr.mxu0 0.0
  %1016 = vmatpush2.msra.mxu0 %v866
  %1017 = vmatprep.subr.mxu0 0.0
  %1018 = vmatpush2.msra.mxu0 %v865
  %1019 = vmatprep.subr.mxu0 0.0
  %1020 = vmatpush2.msra.mxu0 %v864
  %1021 = vmatprep.subr.mxu0 0.0
  %1022 = vmatpush2.msra.mxu0 %v863
  %1023 = vmatprep.subr.mxu0 0.0
  %1024 = vmatpush2.msra.mxu0 %v862
  %1025 = vmatprep.subr.mxu0 0.0
  %1026 = vmatpush2.msra.mxu0 %v861
  %1027 = vmatprep.subr.mxu0 0.0
  %1028 = vmatpush2.msra.mxu0 %v860
  %1029 = vmatprep.subr.mxu0 0.0
  %1030 = vmatpush2.msra.mxu0 %v859
  %1031 = vmatprep.subr.mxu0 0.0
  %1032 = vmatpush2.msra.mxu0 %v858
  %1033 = vmatprep.subr.mxu0 0.0
  %1034 = vmatpush2.msra.mxu0 %v857
  %1035 = vmatprep.subr.mxu0 0.0
  %1036 = vmatpush2.msra.mxu0 %v856
  %1037 = vmatprep.subr.mxu0 0.0
  %1038 = vmatpush2.msra.mxu0 %v855
  %1039 = vmatprep.subr.mxu0 0.0
  %1040 = vmatpush2.msra.mxu0 %v854
  %1041 = vmatprep.subr.mxu0 0.0
  %1042 = vmatpush2.msra.mxu0 %v853
  %1043 = vmatprep.mubr.f32.mxu0 %v908
  %1044 = vmatmul.mubr.f32.gmra.mxu0 %v901
  %v1045 = vpop.f32.mrf.mxu0
  %v1046 = vadd.f32 0.0, %v1045
  %v1047 = vpop.f32.mrf.mxu0
  %1048 = vdwg.mxu0
  %v1049 = vmul.f32 %v976, 0.0078125
  %v1050 = vmul.f32 %v1046, 0.0078125
  %v1051 = vmul.f32 %v1049, %v1049
  %v1052 = vsub.f32 %v1050, %v1051
  %v1053 = vadd.f32 %v1052, 1e-05
  %v1054 = vrsqrt.pop %v1053
  %v1055 = vmul.f32 %v835, %v1054
  %v1056 = vmul.f32 %v1049, %v1055
  %v1057 = vsub.f32 %v836, %v1056
  %vm1058 = vcmask 261120
  %v1060 = vsel %vm1058, %v1055, 0
  %1062 = vmatprep.subr.mxu0 0.0
  %1063 = vmatpush1.msra.mxu0 0.0
  %1064 = vmatprep.subr.mxu0 0.0
  %1065 = vmatpush1.msra.mxu0 0.0
  %1066 = vmatprep.subr.mxu0 0.0
  %1067 = vmatpush1.msra.mxu0 0.0
  %1068 = vmatprep.subr.mxu0 0.0
  %1069 = vmatpush1.msra.mxu0 0.0
  %1070 = vmatprep.subr.mxu0 0.0
  %1071 = vmatpush1.msra.mxu0 0.0
  %1072 = vmatprep.subr.mxu0 0.0
  %1073 = vmatpush1.msra.mxu0 0.0
  %1074 = vmatprep.subr.mxu0 0.0
  %1075 = vmatpush1.msra.mxu0 0.0
  %1076 = vmatprep.subr.mxu0 0.0
  %1077 = vmatpush1.msra.mxu0 0.0
  %1078 = vmatprep.subr.mxu0 0.0
  %1079 = vmatpush1.msra.mxu0 0.0
  %1080 = vmatprep.subr.mxu0 0.0
  %1081 = vmatpush1.msra.mxu0 0.0
  %1082 = vmatprep.subr.mxu0 0.0
  %1083 = vmatpush1.msra.mxu0 0.0
  %1084 = vmatprep.subr.mxu0 0.0
  %1085 = vmatpush1.msra.mxu0 0.0
  %1086 = vmatprep.subr.mxu0 %v876
  %1087 = vmatpush1.msra.mxu0 %v875
  %1088 = vmatprep.subr.mxu0 %v874
  %1089 = vmatpush1.msra.mxu0 %v873
  %1090 = vmatprep.subr.mxu0 %v872
  %1091 = vmatpush1.msra.mxu0 %v871
  %1092 = vmatprep.subr.mxu0 %v870
  %1093 = vmatpush1.msra.mxu0 %v869
  %1094 = vmatprep.subr.mxu0 0.0
  %1095 = vmatpush2.msra.mxu0 0.0
  %1096 = vmatprep.subr.mxu0 0.0
  %1097 = vmatpush2.msra.mxu0 0.0
  %1098 = vmatprep.subr.mxu0 0.0
  %1099 = vmatpush2.msra.mxu0 0.0
  %1100 = vmatprep.subr.mxu0 0.0
  %1101 = vmatpush2.msra.mxu0 0.0
  %1102 = vmatprep.subr.mxu0 0.0
  %1103 = vmatpush2.msra.mxu0 0.0
  %1104 = vmatprep.subr.mxu0 0.0
  %1105 = vmatpush2.msra.mxu0 0.0
  %1106 = vmatprep.subr.mxu0 0.0
  %1107 = vmatpush2.msra.mxu0 0.0
  %1108 = vmatprep.subr.mxu0 0.0
  %1109 = vmatpush2.msra.mxu0 0.0
  %1110 = vmatprep.subr.mxu0 0.0
  %1111 = vmatpush2.msra.mxu0 0.0
  %1112 = vmatprep.subr.mxu0 0.0
  %1113 = vmatpush2.msra.mxu0 0.0
  %1114 = vmatprep.subr.mxu0 0.0
  %1115 = vmatpush2.msra.mxu0 0.0
  %1116 = vmatprep.subr.mxu0 0.0
  %1117 = vmatpush2.msra.mxu0 0.0
  %1118 = vmatprep.subr.mxu0 0.0
  %1119 = vmatpush2.msra.mxu0 0.0
  %1120 = vmatprep.subr.mxu0 0.0
  %1121 = vmatpush2.msra.mxu0 0.0
  %1122 = vmatprep.subr.mxu0 0.0
  %1123 = vmatpush2.msra.mxu0 0.0
  %1124 = vmatprep.subr.mxu0 0.0
  %1125 = vmatpush2.msra.mxu0 0.0
  %1126 = vmatprep.mubr.f32.mxu0 0.0
  %1127 = vmatmul.mubr.f32.gmra.mxu0 %v1060
  %v1128 = vpop.f32.mrf.mxu0
  %v1129 = vadd.f32 0.0, %v1128
  %v1130 = vpop.f32.mrf.mxu0
  %v1131 = vadd.f32 0.0, %v1130
  %1132 = vdwg.mxu0
  %v1134 = vsel %vm1058, %v1057, 0
  %1136 = vmatprep.subr.mxu0 0.0
  %1137 = vmatpush1.msra.mxu0 0.0
  %1138 = vmatprep.subr.mxu0 0.0
  %1139 = vmatpush1.msra.mxu0 0.0
  %1140 = vmatprep.subr.mxu0 0.0
  %1141 = vmatpush1.msra.mxu0 0.0
  %1142 = vmatprep.subr.mxu0 0.0
  %1143 = vmatpush1.msra.mxu0 0.0
  %1144 = vmatprep.subr.mxu0 0.0
  %1145 = vmatpush1.msra.mxu0 0.0
  %1146 = vmatprep.subr.mxu0 0.0
  %1147 = vmatpush1.msra.mxu0 0.0
  %1148 = vmatprep.subr.mxu0 0.0
  %1149 = vmatpush1.msra.mxu0 0.0
  %1150 = vmatprep.subr.mxu0 0.0
  %1151 = vmatpush1.msra.mxu0 0.0
  %1152 = vmatprep.subr.mxu0 0.0
  %1153 = vmatpush1.msra.mxu0 0.0
  %1154 = vmatprep.subr.mxu0 0.0
  %1155 = vmatpush1.msra.mxu0 0.0
  %1156 = vmatprep.subr.mxu0 0.0
  %1157 = vmatpush1.msra.mxu0 0.0
  %1158 = vmatprep.subr.mxu0 0.0
  %1159 = vmatpush1.msra.mxu0 0.0
  %1160 = vmatprep.subr.mxu0 %v876
  %1161 = vmatpush1.msra.mxu0 %v875
  %1162 = vmatprep.subr.mxu0 %v874
  %1163 = vmatpush1.msra.mxu0 %v873
  %1164 = vmatprep.subr.mxu0 %v872
  %1165 = vmatpush1.msra.mxu0 %v871
  %1166 = vmatprep.subr.mxu0 %v870
  %1167 = vmatpush1.msra.mxu0 %v869
  %1168 = vmatprep.subr.mxu0 0.0
  %1169 = vmatpush2.msra.mxu0 0.0
  %1170 = vmatprep.subr.mxu0 0.0
  %1171 = vmatpush2.msra.mxu0 0.0
  %1172 = vmatprep.subr.mxu0 0.0
  %1173 = vmatpush2.msra.mxu0 0.0
  %1174 = vmatprep.subr.mxu0 0.0
  %1175 = vmatpush2.msra.mxu0 0.0
  %1176 = vmatprep.subr.mxu0 0.0
  %1177 = vmatpush2.msra.mxu0 0.0
  %1178 = vmatprep.subr.mxu0 0.0
  %1179 = vmatpush2.msra.mxu0 0.0
  %1180 = vmatprep.subr.mxu0 0.0
  %1181 = vmatpush2.msra.mxu0 0.0
  %1182 = vmatprep.subr.mxu0 0.0
  %1183 = vmatpush2.msra.mxu0 0.0
  %1184 = vmatprep.subr.mxu0 0.0
  %1185 = vmatpush2.msra.mxu0 0.0
  %1186 = vmatprep.subr.mxu0 0.0
  %1187 = vmatpush2.msra.mxu0 0.0
  %1188 = vmatprep.subr.mxu0 0.0
  %1189 = vmatpush2.msra.mxu0 0.0
  %1190 = vmatprep.subr.mxu0 0.0
  %1191 = vmatpush2.msra.mxu0 0.0
  %1192 = vmatprep.subr.mxu0 0.0
  %1193 = vmatpush2.msra.mxu0 0.0
  %1194 = vmatprep.subr.mxu0 0.0
  %1195 = vmatpush2.msra.mxu0 0.0
  %1196 = vmatprep.subr.mxu0 0.0
  %1197 = vmatpush2.msra.mxu0 0.0
  %1198 = vmatprep.subr.mxu0 0.0
  %1199 = vmatpush2.msra.mxu0 0.0
  %1200 = vmatprep.mubr.f32.mxu0 0.0
  %1201 = vmatmul.mubr.f32.gmra.mxu0 %v1134
  %v1202 = vpop.f32.mrf.mxu0
  %v1203 = vadd.f32 0.0, %v1202
  %v1204 = vpop.f32.mrf.mxu0
  %v1205 = vadd.f32 0.0, %v1204
  %1206 = vdwg.mxu0
  %v1207 = vlaneseq
  %v1208 = vshrl.u32 %v1207, 7
  %v1209 = vsub.s32 0, %v1208
  %v1210 = vrot.slane %v1129, %v1209
  %v1211 = vlaneseq
  %v1212 = vshrl.u32 %v1211, 7
  %v1213 = vsub.s32 0, %v1212
  %v1214 = vrot.slane %v1131, %v1213
  %v1215 = vmul.f32 %v831, %v1210
  %v1216 = vmul.f32 %v832, %v1214
  %v1217 = vmul.f32 %v833, %v1210
  %v1218 = vmul.f32 %v834, %v1214
  %v1219 = vlaneseq
  %v1220 = vshrl.u32 %v1219, 7
  %v1221 = vsub.s32 0, %v1220
  %v1222 = vrot.slane %v1203, %v1221
  %v1223 = vlaneseq
  %v1224 = vshrl.u32 %v1223, 7
  %v1225 = vsub.s32 0, %v1224
  %v1226 = vrot.slane %v1205, %v1225
  %v1227 = vadd.f32 %v1215, %v1222
  %v1228 = vadd.f32 %v1216, %v1226
  %v1229 = vadd.f32 %v1217, %v1222
  %v1230 = vadd.f32 %v1218, %v1226
  %v1231 = vmax.f32 %v1227, 0.0
  %v1232 = vmax.f32 %v1228, 0.0
  %v1233 = vmax.f32 %v1229, 0.0
  %v1234 = vmax.f32 %v1230, 0.0
  %1235 = vst [vmem:[#allocation2] sm:$0xff] 0.0
  %1236 = vst [vmem:[#allocation2 + $0x8] sm:$0xff] 0.0
  %1237 = vst [vmem:[#allocation2 + $0x10] sm:$0xff] 0.0
  %1238 = vst [vmem:[#allocation2 + $0x18] sm:$0xff] 0.0
  %1239 = vst [vmem:[#allocation2 + $0x20] sm:$0xf] 0.0
  %1240 = vst [vmem:[#allocation2 + $0x28] sm:$0xf] 0.0
  %v1243 = vrot.slane %v1231, 7
  %v1244 = vrot.slane %v1232, 7
  %1247 = vst [vmem:[#allocation2] sm:$0xfe] %v1243
  %1248 = vst [vmem:[#allocation2 + $0x8] sm:$0xfe] %v1244
  %1249 = vst [vmem:[#allocation2 + $0x10] sm:$0x1] %v1243
  %1250 = vst [vmem:[#allocation2 + $0x18] sm:$0x1] %v1244
  %v1253 = vrot.slane %v1233, 5
  %v1254 = vrot.slane %v1234, 5
  %1257 = vst [vmem:[#allocation2 + $0x10] sm:$0xf8] %v1253
  %1258 = vst [vmem:[#allocation2 + $0x18] sm:$0xf8] %v1254
  %1259 = vst [vmem:[#allocation2 + $0x20] sm:$0x7] %v1253
  %1260 = vst [vmem:[#allocation2 + $0x28] sm:$0x7] %v1254
  %v1261 = vld [vmem:[#allocation2] sm:$0xff]
  %v1262 = vld [vmem:[#allocation2 + $0x8] sm:$0xff]
  %v1263 = vld [vmem:[#allocation2 + $0x10] sm:$0xfc]
  %v1264 = vld [vmem:[#allocation2 + $0x18] sm:$0xfc]
  %v1265 = vld [vmem:[#allocation2 + $0x20] sm:$0x3]
  %v1266 = vld [vmem:[#allocation2 + $0x28] sm:$0x3]
  %v1271 = vrot.slane %v1263, 2
  %v1272 = vrot.slane %v1265, 2
  %v1273 = vsel %vm42, %v1271, %v1272
  %v1274 = vrot.slane %v1264, 2
  %v1275 = vrot.slane %v1266, 2
  %v1276 = vsel %vm42, %v1274, %v1275
  %v1279 = vpack.c.bf16 %v1273, %v1261
  %v1280 = vpack.c.bf16 %v1276, %v1262
  %v1281 = vld [vmem:[%s2] sm:$0xff]
  %v1282 = vld [vmem:[%s2 + $0x8] sm:$0xff]
  %v1283 = vld [vmem:[%s2 + $0x10] sm:$0xff]
  %v1284 = vld [vmem:[%s2 + $0x18] sm:$0xff]
  %v1285 = vld [vmem:[%s2 + $0x20] sm:$0xff]
  %v1286 = vld [vmem:[%s2 + $0x28] sm:$0xff]
  %v1287 = vld [vmem:[%s2 + $0x30] sm:$0xff]
  %v1288 = vld [vmem:[%s2 + $0x38] sm:$0xff]
  %v1289 = vld [vmem:[%s2 + $0x40] sm:$0xff]
  %v1290 = vld [vmem:[%s2 + $0x48] sm:$0xff]
  %v1291 = vld [vmem:[%s2 + $0x50] sm:$0xff]
  %v1292 = vld [vmem:[%s2 + $0x58] sm:$0xff]
  %v1293 = vld [vmem:[%s2 + $0x60] sm:$0xff]
  %v1294 = vld [vmem:[%s2 + $0x68] sm:$0xff]
  %v1295 = vld [vmem:[%s2 + $0x70] sm:$0xff]
  %v1296 = vld [vmem:[%s2 + $0x78] sm:$0xff]
  %v1297 = vld [vmem:[%s2 + $0x80] sm:$0xff]
  %v1298 = vld [vmem:[%s2 + $0x88] sm:$0xff]
  %v1299 = vld [vmem:[%s2 + $0x90] sm:$0xff]
  %v1300 = vld [vmem:[%s2 + $0x98] sm:$0xff]
  %v1301 = vld [vmem:[%s2 + $0xa0] sm:$0xff]
  %v1302 = vld [vmem:[%s2 + $0xa8] sm:$0xff]
  %v1303 = vld [vmem:[%s2 + $0xb0] sm:$0xff]
  %v1304 = vld [vmem:[%s2 + $0xb8] sm:$0xff]
  %v1305 = vld [vmem:[%s2 + $0xc0] sm:$0xff]
  %v1306 = vld [vmem:[%s2 + $0xc8] sm:$0xff]
  %v1307 = vld [vmem:[%s2 + $0xd0] sm:$0xff]
  %v1308 = vld [vmem:[%s2 + $0xd8] sm:$0xff]
  %v1309 = vld [vmem:[%s2 + $0xe0] sm:$0xff]
  %v1310 = vld [vmem:[%s2 + $0xe8] sm:$0xff]
  %v1311 = vld [vmem:[%s2 + $0xf0] sm:$0xff]
  %v1312 = vld [vmem:[%s2 + $0xf8] sm:$0xff]
  %v1313 = vld [vmem:[#allocation2] sm:$0xfe]
  %v1314 = vld [vmem:[#allocation2 + $0x8] sm:$0xfe]
  %v1315 = vld [vmem:[#allocation2 + $0x10] sm:$0x1]
  %v1316 = vld [vmem:[#allocation2 + $0x18] sm:$0x1]
  %v1317 = vld [vmem:[#allocation2 + $0x10] sm:$0xf8]
  %v1318 = vld [vmem:[#allocation2 + $0x18] sm:$0xf8]
  %v1319 = vld [vmem:[#allocation2 + $0x20] sm:$0x7]
  %v1320 = vld [vmem:[#allocation2 + $0x28] sm:$0x7]
  %v1325 = vrot.slane %v1313, 1
  %v1326 = vrot.slane %v1315, 1
  %v1327 = vsel %vm97, %v1325, %v1326
  %v1328 = vrot.slane %v1314, 1
  %v1329 = vrot.slane %v1316, 1
  %v1330 = vsel %vm97, %v1328, %v1329
  %v1337 = vrot.slane %v1317, 3
  %v1338 = vrot.slane %v1319, 3
  %v1339 = vsel %vm110, %v1337, %v1338
  %v1340 = vrot.slane %v1318, 3
  %v1341 = vrot.slane %v1320, 3
  %v1342 = vsel %vm110, %v1340, %v1341
  %v1345 = vpack.c.bf16 %v1339, %v1327
  %v1346 = vpack.c.bf16 %v1342, %v1330
  %s1347 = scalar_lea.vmem %s2, 256
  %v1348 = vld [vmem:[%s1347] sm:$0xff]
  %v1349 = vld [vmem:[%s1347 + $0x8] sm:$0xff]
  %v1350 = vld [vmem:[%s1347 + $0x10] sm:$0xff]
  %v1351 = vld [vmem:[%s1347 + $0x18] sm:$0xff]
  %v1352 = vld [vmem:[%s1347 + $0x20] sm:$0xff]
  %v1353 = vld [vmem:[%s1347 + $0x28] sm:$0xff]
  %v1354 = vld [vmem:[%s1347 + $0x30] sm:$0xff]
  %v1355 = vld [vmem:[%s1347 + $0x38] sm:$0xff]
  %v1356 = vld [vmem:[%s1347 + $0x40] sm:$0xff]
  %v1357 = vld [vmem:[%s1347 + $0x48] sm:$0xff]
  %v1358 = vld [vmem:[%s1347 + $0x50] sm:$0xff]
  %v1359 = vld [vmem:[%s1347 + $0x58] sm:$0xff]
  %v1360 = vld [vmem:[%s1347 + $0x60] sm:$0xff]
  %v1361 = vld [vmem:[%s1347 + $0x68] sm:$0xff]
  %v1362 = vld [vmem:[%s1347 + $0x70] sm:$0xff]
  %v1363 = vld [vmem:[%s1347 + $0x78] sm:$0xff]
  %v1364 = vld [vmem:[%s1347 + $0x80] sm:$0xff]
  %v1365 = vld [vmem:[%s1347 + $0x88] sm:$0xff]
  %v1366 = vld [vmem:[%s1347 + $0x90] sm:$0xff]
  %v1367 = vld [vmem:[%s1347 + $0x98] sm:$0xff]
  %v1368 = vld [vmem:[%s1347 + $0xa0] sm:$0xff]
  %v1369 = vld [vmem:[%s1347 + $0xa8] sm:$0xff]
  %v1370 = vld [vmem:[%s1347 + $0xb0] sm:$0xff]
  %v1371 = vld [vmem:[%s1347 + $0xb8] sm:$0xff]
  %v1372 = vld [vmem:[%s1347 + $0xc0] sm:$0xff]
  %v1373 = vld [vmem:[%s1347 + $0xc8] sm:$0xff]
  %v1374 = vld [vmem:[%s1347 + $0xd0] sm:$0xff]
  %v1375 = vld [vmem:[%s1347 + $0xd8] sm:$0xff]
  %v1376 = vld [vmem:[%s1347 + $0xe0] sm:$0xff]
  %v1377 = vld [vmem:[%s1347 + $0xe8] sm:$0xff]
  %v1378 = vld [vmem:[%s1347 + $0xf0] sm:$0xff]
  %v1379 = vld [vmem:[%s1347 + $0xf8] sm:$0xff]
  %v1412 = vunpack.c.l.b16 %v1348
  %v1413 = vunpack.c.h.b16 %v1348
  %v1414 = vunpack.c.l.b16 %v1349
  %v1415 = vunpack.c.h.b16 %v1349
  %v1416 = vunpack.c.l.b16 %v1350
  %v1417 = vunpack.c.h.b16 %v1350
  %v1418 = vunpack.c.l.b16 %v1351
  %v1419 = vunpack.c.h.b16 %v1351
  %v1420 = vunpack.c.l.b16 %v1352
  %v1421 = vunpack.c.h.b16 %v1352
  %v1422 = vunpack.c.l.b16 %v1353
  %v1423 = vunpack.c.h.b16 %v1353
  %v1424 = vunpack.c.l.b16 %v1354
  %v1425 = vunpack.c.h.b16 %v1354
  %v1426 = vunpack.c.l.b16 %v1355
  %v1427 = vunpack.c.h.b16 %v1355
  %v1428 = vunpack.c.l.b16 %v1356
  %v1429 = vunpack.c.h.b16 %v1356
  %v1430 = vunpack.c.l.b16 %v1357
  %v1431 = vunpack.c.h.b16 %v1357
  %v1432 = vunpack.c.l.b16 %v1358
  %v1433 = vunpack.c.h.b16 %v1358
  %v1434 = vunpack.c.l.b16 %v1359
  %v1435 = vunpack.c.h.b16 %v1359
  %v1436 = vunpack.c.l.b16 %v1360
  %v1437 = vunpack.c.h.b16 %v1360
  %v1438 = vunpack.c.l.b16 %v1361
  %v1439 = vunpack.c.h.b16 %v1361
  %v1440 = vunpack.c.l.b16 %v1362
  %v1441 = vunpack.c.h.b16 %v1362
  %v1442 = vunpack.c.l.b16 %v1363
  %v1443 = vunpack.c.h.b16 %v1363
  %v1444 = vunpack.c.l.b16 %v1364
  %v1445 = vunpack.c.h.b16 %v1364
  %v1446 = vunpack.c.l.b16 %v1365
  %v1447 = vunpack.c.h.b16 %v1365
  %v1448 = vunpack.c.l.b16 %v1366
  %v1449 = vunpack.c.h.b16 %v1366
  %v1450 = vunpack.c.l.b16 %v1367
  %v1451 = vunpack.c.h.b16 %v1367
  %v1452 = vunpack.c.l.b16 %v1368
  %v1453 = vunpack.c.h.b16 %v1368
  %v1454 = vunpack.c.l.b16 %v1369
  %v1455 = vunpack.c.h.b16 %v1369
  %v1456 = vunpack.c.l.b16 %v1370
  %v1457 = vunpack.c.h.b16 %v1370
  %v1458 = vunpack.c.l.b16 %v1371
  %v1459 = vunpack.c.h.b16 %v1371
  %v1460 = vunpack.c.l.b16 %v1372
  %v1461 = vunpack.c.h.b16 %v1372
  %v1462 = vunpack.c.l.b16 %v1373
  %v1463 = vunpack.c.h.b16 %v1373
  %v1464 = vunpack.c.l.b16 %v1374
  %v1465 = vunpack.c.h.b16 %v1374
  %v1466 = vunpack.c.l.b16 %v1375
  %v1467 = vunpack.c.h.b16 %v1375
  %v1468 = vunpack.c.l.b16 %v1376
  %v1469 = vunpack.c.h.b16 %v1376
  %v1470 = vunpack.c.l.b16 %v1377
  %v1471 = vunpack.c.h.b16 %v1377
  %v1472 = vunpack.c.l.b16 %v1378
  %v1473 = vunpack.c.h.b16 %v1378
  %v1474 = vunpack.c.l.b16 %v1379
  %v1475 = vunpack.c.h.b16 %v1379
  %v1476 = vpack.c.b16 %v1414, %v1412
  %v1477 = vpack.c.b16 %v1415, %v1413
  %v1478 = vpack.c.b16 %v1418, %v1416
  %v1479 = vpack.c.b16 %v1419, %v1417
  %v1480 = vpack.c.b16 %v1422, %v1420
  %v1481 = vpack.c.b16 %v1423, %v1421
  %v1482 = vpack.c.b16 %v1426, %v1424
  %v1483 = vpack.c.b16 %v1427, %v1425
  %v1484 = vpack.c.b16 %v1430, %v1428
  %v1485 = vpack.c.b16 %v1431, %v1429
  %v1486 = vpack.c.b16 %v1434, %v1432
  %v1487 = vpack.c.b16 %v1435, %v1433
  %v1488 = vpack.c.b16 %v1438, %v1436
  %v1489 = vpack.c.b16 %v1439, %v1437
  %v1490 = vpack.c.b16 %v1442, %v1440
  %v1491 = vpack.c.b16 %v1443, %v1441
  %v1492 = vpack.c.b16 %v1446, %v1444
  %v1493 = vpack.c.b16 %v1447, %v1445
  %v1494 = vpack.c.b16 %v1450, %v1448
  %v1495 = vpack.c.b16 %v1451, %v1449
  %v1496 = vpack.c.b16 %v1454, %v1452
  %v1497 = vpack.c.b16 %v1455, %v1453
  %v1498 = vpack.c.b16 %v1458, %v1456
  %v1499 = vpack.c.b16 %v1459, %v1457
  %v1500 = vpack.c.b16 %v1462, %v1460
  %v1501 = vpack.c.b16 %v1463, %v1461
  %v1502 = vpack.c.b16 %v1466, %v1464
  %v1503 = vpack.c.b16 %v1467, %v1465
  %v1504 = vpack.c.b16 %v1470, %v1468
  %v1505 = vpack.c.b16 %v1471, %v1469
  %v1506 = vpack.c.b16 %v1474, %v1472
  %v1507 = vpack.c.b16 %v1475, %v1473
  %1540 = vmatprep.subr.bf16.mxu0 %v1491
  %1541 = vmatpush1.bf16.msra.mxu0 %v1490
  %1542 = vmatprep.subr.bf16.mxu0 %v1489
  %1543 = vmatpush1.bf16.msra.mxu0 %v1488
  %1544 = vmatprep.subr.bf16.mxu0 %v1487
  %1545 = vmatpush1.bf16.msra.mxu0 %v1486
  %1546 = vmatprep.subr.bf16.mxu0 %v1485
  %1547 = vmatpush1.bf16.msra.mxu0 %v1484
  %1548 = vmatprep.subr.bf16.mxu0 %v1483
  %1549 = vmatpush1.bf16.msra.mxu0 %v1482
  %1550 = vmatprep.subr.bf16.mxu0 %v1481
  %1551 = vmatpush1.bf16.msra.mxu0 %v1480
  %1552 = vmatprep.subr.bf16.mxu0 %v1479
  %1553 = vmatpush1.bf16.msra.mxu0 %v1478
  %1554 = vmatprep.subr.bf16.mxu0 %v1477
  %1555 = vmatpush1.bf16.msra.mxu0 %v1476
  %1556 = vmatprep.subr.bf16.mxu0 %v1507
  %1557 = vmatpush2.bf16.msra.mxu0 %v1506
  %1558 = vmatprep.subr.bf16.mxu0 %v1505
  %1559 = vmatpush2.bf16.msra.mxu0 %v1504
  %1560 = vmatprep.subr.bf16.mxu0 %v1503
  %1561 = vmatpush2.bf16.msra.mxu0 %v1502
  %1562 = vmatprep.subr.bf16.mxu0 %v1501
  %1563 = vmatpush2.bf16.msra.mxu0 %v1500
  %1564 = vmatprep.subr.bf16.mxu0 %v1499
  %1565 = vmatpush2.bf16.msra.mxu0 %v1498
  %1566 = vmatprep.subr.bf16.mxu0 %v1497
  %1567 = vmatpush2.bf16.msra.mxu0 %v1496
  %1568 = vmatprep.subr.bf16.mxu0 %v1495
  %1569 = vmatpush2.bf16.msra.mxu0 %v1494
  %1570 = vmatprep.subr.bf16.mxu0 %v1493
  %1571 = vmatpush2.bf16.msra.mxu0 %v1492
  %1572 = vmatprep.mubr.bf16.mxu0 %v1346
  %1573 = vmatmul.mubr.bf16.gmra.mxu0 %v1345
  %v1574 = vpop.f32.mrf.mxu0
  %v1575 = vadd.f32 0.0, %v1574
  %v1576 = vpop.f32.mrf.mxu0
  %v1577 = vadd.f32 0.0, %v1576
  %v1578 = vpop.f32.mrf.mxu0
  %v1579 = vadd.f32 0.0, %v1578
  %v1580 = vpop.f32.mrf.mxu0
  %v1581 = vadd.f32 0.0, %v1580
  %1582 = vdwg.mxu0
  %v1615 = vunpack.c.l.b16 %v1281
  %v1616 = vunpack.c.h.b16 %v1281
  %v1617 = vunpack.c.l.b16 %v1282
  %v1618 = vunpack.c.h.b16 %v1282
  %v1619 = vunpack.c.l.b16 %v1283
  %v1620 = vunpack.c.h.b16 %v1283
  %v1621 = vunpack.c.l.b16 %v1284
  %v1622 = vunpack.c.h.b16 %v1284
  %v1623 = vunpack.c.l.b16 %v1285
  %v1624 = vunpack.c.h.b16 %v1285
  %v1625 = vunpack.c.l.b16 %v1286
  %v1626 = vunpack.c.h.b16 %v1286
  %v1627 = vunpack.c.l.b16 %v1287
  %v1628 = vunpack.c.h.b16 %v1287
  %v1629 = vunpack.c.l.b16 %v1288
  %v1630 = vunpack.c.h.b16 %v1288
  %v1631 = vunpack.c.l.b16 %v1289
  %v1632 = vunpack.c.h.b16 %v1289
  %v1633 = vunpack.c.l.b16 %v1290
  %v1634 = vunpack.c.h.b16 %v1290
  %v1635 = vunpack.c.l.b16 %v1291
  %v1636 = vunpack.c.h.b16 %v1291
  %v1637 = vunpack.c.l.b16 %v1292
  %v1638 = vunpack.c.h.b16 %v1292
  %v1639 = vunpack.c.l.b16 %v1293
  %v1640 = vunpack.c.h.b16 %v1293
  %v1641 = vunpack.c.l.b16 %v1294
  %v1642 = vunpack.c.h.b16 %v1294
  %v1643 = vunpack.c.l.b16 %v1295
  %v1644 = vunpack.c.h.b16 %v1295
  %v1645 = vunpack.c.l.b16 %v1296
  %v1646 = vunpack.c.h.b16 %v1296
  %v1647 = vunpack.c.l.b16 %v1297
  %v1648 = vunpack.c.h.b16 %v1297
  %v1649 = vunpack.c.l.b16 %v1298
  %v1650 = vunpack.c.h.b16 %v1298
  %v1651 = vunpack.c.l.b16 %v1299
  %v1652 = vunpack.c.h.b16 %v1299
  %v1653 = vunpack.c.l.b16 %v1300
  %v1654 = vunpack.c.h.b16 %v1300
  %v1655 = vunpack.c.l.b16 %v1301
  %v1656 = vunpack.c.h.b16 %v1301
  %v1657 = vunpack.c.l.b16 %v1302
  %v1658 = vunpack.c.h.b16 %v1302
  %v1659 = vunpack.c.l.b16 %v1303
  %v1660 = vunpack.c.h.b16 %v1303
  %v1661 = vunpack.c.l.b16 %v1304
  %v1662 = vunpack.c.h.b16 %v1304
  %v1663 = vunpack.c.l.b16 %v1305
  %v1664 = vunpack.c.h.b16 %v1305
  %v1665 = vunpack.c.l.b16 %v1306
  %v1666 = vunpack.c.h.b16 %v1306
  %v1667 = vunpack.c.l.b16 %v1307
  %v1668 = vunpack.c.h.b16 %v1307
  %v1669 = vunpack.c.l.b16 %v1308
  %v1670 = vunpack.c.h.b16 %v1308
  %v1671 = vunpack.c.l.b16 %v1309
  %v1672 = vunpack.c.h.b16 %v1309
  %v1673 = vunpack.c.l.b16 %v1310
  %v1674 = vunpack.c.h.b16 %v1310
  %v1675 = vunpack.c.l.b16 %v1311
  %v1676 = vunpack.c.h.b16 %v1311
  %v1677 = vunpack.c.l.b16 %v1312
  %v1678 = vunpack.c.h.b16 %v1312
  %v1679 = vpack.c.b16 %v1617, %v1615
  %v1680 = vpack.c.b16 %v1618, %v1616
  %v1681 = vpack.c.b16 %v1621, %v1619
  %v1682 = vpack.c.b16 %v1622, %v1620
  %v1683 = vpack.c.b16 %v1625, %v1623
  %v1684 = vpack.c.b16 %v1626, %v1624
  %v1685 = vpack.c.b16 %v1629, %v1627
  %v1686 = vpack.c.b16 %v1630, %v1628
  %v1687 = vpack.c.b16 %v1633, %v1631
  %v1688 = vpack.c.b16 %v1634, %v1632
  %v1689 = vpack.c.b16 %v1637, %v1635
  %v1690 = vpack.c.b16 %v1638, %v1636
  %v1691 = vpack.c.b16 %v1641, %v1639
  %v1692 = vpack.c.b16 %v1642, %v1640
  %v1693 = vpack.c.b16 %v1645, %v1643
  %v1694 = vpack.c.b16 %v1646, %v1644
  %v1695 = vpack.c.b16 %v1649, %v1647
  %v1696 = vpack.c.b16 %v1650, %v1648
  %v1697 = vpack.c.b16 %v1653, %v1651
  %v1698 = vpack.c.b16 %v1654, %v1652
  %v1699 = vpack.c.b16 %v1657, %v1655
  %v1700 = vpack.c.b16 %v1658, %v1656
  %v1701 = vpack.c.b16 %v1661, %v1659
  %v1702 = vpack.c.b16 %v1662, %v1660
  %v1703 = vpack.c.b16 %v1665, %v1663
  %v1704 = vpack.c.b16 %v1666, %v1664
  %v1705 = vpack.c.b16 %v1669, %v1667
  %v1706 = vpack.c.b16 %v1670, %v1668
  %v1707 = vpack.c.b16 %v1673, %v1671
  %v1708 = vpack.c.b16 %v1674, %v1672
  %v1709 = vpack.c.b16 %v1677, %v1675
  %v1710 = vpack.c.b16 %v1678, %v1676
  %1743 = vmatprep.subr.bf16.mxu0 %v1694
  %1744 = vmatpush1.bf16.msra.mxu0 %v1693
  %1745 = vmatprep.subr.bf16.mxu0 %v1692
  %1746 = vmatpush1.bf16.msra.mxu0 %v1691
  %1747 = vmatprep.subr.bf16.mxu0 %v1690
  %1748 = vmatpush1.bf16.msra.mxu0 %v1689
  %1749 = vmatprep.subr.bf16.mxu0 %v1688
  %1750 = vmatpush1.bf16.msra.mxu0 %v1687
  %1751 = vmatprep.subr.bf16.mxu0 %v1686
  %1752 = vmatpush1.bf16.msra.mxu0 %v1685
  %1753 = vmatprep.subr.bf16.mxu0 %v1684
  %1754 = vmatpush1.bf16.msra.mxu0 %v1683
  %1755 = vmatprep.subr.bf16.mxu0 %v1682
  %1756 = vmatpush1.bf16.msra.mxu0 %v1681
  %1757 = vmatprep.subr.bf16.mxu0 %v1680
  %1758 = vmatpush1.bf16.msra.mxu0 %v1679
  %1759 = vmatprep.subr.bf16.mxu0 %v1710
  %1760 = vmatpush2.bf16.msra.mxu0 %v1709
  %1761 = vmatprep.subr.bf16.mxu0 %v1708
  %1762 = vmatpush2.bf16.msra.mxu0 %v1707
  %1763 = vmatprep.subr.bf16.mxu0 %v1706
  %1764 = vmatpush2.bf16.msra.mxu0 %v1705
  %1765 = vmatprep.subr.bf16.mxu0 %v1704
  %1766 = vmatpush2.bf16.msra.mxu0 %v1703
  %1767 = vmatprep.subr.bf16.mxu0 %v1702
  %1768 = vmatpush2.bf16.msra.mxu0 %v1701
  %1769 = vmatprep.subr.bf16.mxu0 %v1700
  %1770 = vmatpush2.bf16.msra.mxu0 %v1699
  %1771 = vmatprep.subr.bf16.mxu0 %v1698
  %1772 = vmatpush2.bf16.msra.mxu0 %v1697
  %1773 = vmatprep.subr.bf16.mxu0 %v1696
  %1774 = vmatpush2.bf16.msra.mxu0 %v1695
  %1775 = vmatprep.mubr.bf16.mxu0 %v1280
  %1776 = vmatmul.mubr.bf16.gmra.mxu0 %v1279
  %v1777 = vpop.f32.mrf.mxu0
  %v1778 = vadd.f32 %v1575, %v1777
  %v1779 = vpop.f32.mrf.mxu0
  %v1780 = vadd.f32 %v1577, %v1779
  %v1781 = vpop.f32.mrf.mxu0
  %v1782 = vadd.f32 %v1579, %v1781
  %v1783 = vpop.f32.mrf.mxu0
  %v1784 = vadd.f32 %v1581, %v1783
  %1785 = vdwg.mxu0
  %v1786 = vld [vmem:[#allocation2] sm:$0xfc]
  %v1787 = vld [vmem:[#allocation2 + $0x8] sm:$0xfc]
  %v1788 = vld [vmem:[#allocation2 + $0x10] sm:$0x3]
  %v1789 = vld [vmem:[#allocation2 + $0x18] sm:$0x3]
  %v1790 = vld [vmem:[#allocation2 + $0x10] sm:$0xf0]
  %v1791 = vld [vmem:[#allocation2 + $0x18] sm:$0xf0]
  %v1792 = vld [vmem:[#allocation2 + $0x20] sm:$0xf]
  %v1793 = vld [vmem:[#allocation2 + $0x28] sm:$0xf]
  %v1798 = vrot.slane %v1786, 2
  %v1799 = vrot.slane %v1788, 2
  %v1800 = vsel %vm42, %v1798, %v1799
  %v1801 = vrot.slane %v1787, 2
  %v1802 = vrot.slane %v1789, 2
  %v1803 = vsel %vm42, %v1801, %v1802
  %v1810 = vrot.slane %v1790, 4
  %v1811 = vrot.slane %v1792, 4
  %v1812 = vsel %vm584, %v1810, %v1811
  %v1813 = vrot.slane %v1791, 4
  %v1814 = vrot.slane %v1793, 4
  %v1815 = vsel %vm584, %v1813, %v1814
  %v1818 = vpack.c.bf16 %v1812, %v1800
  %v1819 = vpack.c.bf16 %v1815, %v1803
  %s1820 = scalar_lea.vmem %s2, 512
  %v1821 = vld [vmem:[%s1820] sm:$0xff]
  %v1822 = vld [vmem:[%s1820 + $0x8] sm:$0xff]
  %v1823 = vld [vmem:[%s1820 + $0x10] sm:$0xff]
  %v1824 = vld [vmem:[%s1820 + $0x18] sm:$0xff]
  %v1825 = vld [vmem:[%s1820 + $0x20] sm:$0xff]
  %v1826 = vld [vmem:[%s1820 + $0x28] sm:$0xff]
  %v1827 = vld [vmem:[%s1820 + $0x30] sm:$0xff]
  %v1828 = vld [vmem:[%s1820 + $0x38] sm:$0xff]
  %v1829 = vld [vmem:[%s1820 + $0x40] sm:$0xff]
  %v1830 = vld [vmem:[%s1820 + $0x48] sm:$0xff]
  %v1831 = vld [vmem:[%s1820 + $0x50] sm:$0xff]
  %v1832 = vld [vmem:[%s1820 + $0x58] sm:$0xff]
  %v1833 = vld [vmem:[%s1820 + $0x60] sm:$0xff]
  %v1834 = vld [vmem:[%s1820 + $0x68] sm:$0xff]
  %v1835 = vld [vmem:[%s1820 + $0x70] sm:$0xff]
  %v1836 = vld [vmem:[%s1820 + $0x78] sm:$0xff]
  %v1837 = vld [vmem:[%s1820 + $0x80] sm:$0xff]
  %v1838 = vld [vmem:[%s1820 + $0x88] sm:$0xff]
  %v1839 = vld [vmem:[%s1820 + $0x90] sm:$0xff]
  %v1840 = vld [vmem:[%s1820 + $0x98] sm:$0xff]
  %v1841 = vld [vmem:[%s1820 + $0xa0] sm:$0xff]
  %v1842 = vld [vmem:[%s1820 + $0xa8] sm:$0xff]
  %v1843 = vld [vmem:[%s1820 + $0xb0] sm:$0xff]
  %v1844 = vld [vmem:[%s1820 + $0xb8] sm:$0xff]
  %v1845 = vld [vmem:[%s1820 + $0xc0] sm:$0xff]
  %v1846 = vld [vmem:[%s1820 + $0xc8] sm:$0xff]
  %v1847 = vld [vmem:[%s1820 + $0xd0] sm:$0xff]
  %v1848 = vld [vmem:[%s1820 + $0xd8] sm:$0xff]
  %v1849 = vld [vmem:[%s1820 + $0xe0] sm:$0xff]
  %v1850 = vld [vmem:[%s1820 + $0xe8] sm:$0xff]
  %v1851 = vld [vmem:[%s1820 + $0xf0] sm:$0xff]
  %v1852 = vld [vmem:[%s1820 + $0xf8] sm:$0xff]
  %v1885 = vunpack.c.l.b16 %v1821
  %v1886 = vunpack.c.h.b16 %v1821
  %v1887 = vunpack.c.l.b16 %v1822
  %v1888 = vunpack.c.h.b16 %v1822
  %v1889 = vunpack.c.l.b16 %v1823
  %v1890 = vunpack.c.h.b16 %v1823
  %v1891 = vunpack.c.l.b16 %v1824
  %v1892 = vunpack.c.h.b16 %v1824
  %v1893 = vunpack.c.l.b16 %v1825
  %v1894 = vunpack.c.h.b16 %v1825
  %v1895 = vunpack.c.l.b16 %v1826
  %v1896 = vunpack.c.h.b16 %v1826
  %v1897 = vunpack.c.l.b16 %v1827
  %v1898 = vunpack.c.h.b16 %v1827
  %v1899 = vunpack.c.l.b16 %v1828
  %v1900 = vunpack.c.h.b16 %v1828
  %v1901 = vunpack.c.l.b16 %v1829
  %v1902 = vunpack.c.h.b16 %v1829
  %v1903 = vunpack.c.l.b16 %v1830
  %v1904 = vunpack.c.h.b16 %v1830
  %v1905 = vunpack.c.l.b16 %v1831
  %v1906 = vunpack.c.h.b16 %v1831
  %v1907 = vunpack.c.l.b16 %v1832
  %v1908 = vunpack.c.h.b16 %v1832
  %v1909 = vunpack.c.l.b16 %v1833
  %v1910 = vunpack.c.h.b16 %v1833
  %v1911 = vunpack.c.l.b16 %v1834
  %v1912 = vunpack.c.h.b16 %v1834
  %v1913 = vunpack.c.l.b16 %v1835
  %v1914 = vunpack.c.h.b16 %v1835
  %v1915 = vunpack.c.l.b16 %v1836
  %v1916 = vunpack.c.h.b16 %v1836
  %v1917 = vunpack.c.l.b16 %v1837
  %v1918 = vunpack.c.h.b16 %v1837
  %v1919 = vunpack.c.l.b16 %v1838
  %v1920 = vunpack.c.h.b16 %v1838
  %v1921 = vunpack.c.l.b16 %v1839
  %v1922 = vunpack.c.h.b16 %v1839
  %v1923 = vunpack.c.l.b16 %v1840
  %v1924 = vunpack.c.h.b16 %v1840
  %v1925 = vunpack.c.l.b16 %v1841
  %v1926 = vunpack.c.h.b16 %v1841
  %v1927 = vunpack.c.l.b16 %v1842
  %v1928 = vunpack.c.h.b16 %v1842
  %v1929 = vunpack.c.l.b16 %v1843
  %v1930 = vunpack.c.h.b16 %v1843
  %v1931 = vunpack.c.l.b16 %v1844
  %v1932 = vunpack.c.h.b16 %v1844
  %v1933 = vunpack.c.l.b16 %v1845
  %v1934 = vunpack.c.h.b16 %v1845
  %v1935 = vunpack.c.l.b16 %v1846
  %v1936 = vunpack.c.h.b16 %v1846
  %v1937 = vunpack.c.l.b16 %v1847
  %v1938 = vunpack.c.h.b16 %v1847
  %v1939 = vunpack.c.l.b16 %v1848
  %v1940 = vunpack.c.h.b16 %v1848
  %v1941 = vunpack.c.l.b16 %v1849
  %v1942 = vunpack.c.h.b16 %v1849
  %v1943 = vunpack.c.l.b16 %v1850
  %v1944 = vunpack.c.h.b16 %v1850
  %v1945 = vunpack.c.l.b16 %v1851
  %v1946 = vunpack.c.h.b16 %v1851
  %v1947 = vunpack.c.l.b16 %v1852
  %v1948 = vunpack.c.h.b16 %v1852
  %v1949 = vpack.c.b16 %v1887, %v1885
  %v1950 = vpack.c.b16 %v1888, %v1886
  %v1951 = vpack.c.b16 %v1891, %v1889
  %v1952 = vpack.c.b16 %v1892, %v1890
  %v1953 = vpack.c.b16 %v1895, %v1893
  %v1954 = vpack.c.b16 %v1896, %v1894
  %v1955 = vpack.c.b16 %v1899, %v1897
  %v1956 = vpack.c.b16 %v1900, %v1898
  %v1957 = vpack.c.b16 %v1903, %v1901
  %v1958 = vpack.c.b16 %v1904, %v1902
  %v1959 = vpack.c.b16 %v1907, %v1905
  %v1960 = vpack.c.b16 %v1908, %v1906
  %v1961 = vpack.c.b16 %v1911, %v1909
  %v1962 = vpack.c.b16 %v1912, %v1910
  %v1963 = vpack.c.b16 %v1915, %v1913
  %v1964 = vpack.c.b16 %v1916, %v1914
  %v1965 = vpack.c.b16 %v1919, %v1917
  %v1966 = vpack.c.b16 %v1920, %v1918
  %v1967 = vpack.c.b16 %v1923, %v1921
  %v1968 = vpack.c.b16 %v1924, %v1922
  %v1969 = vpack.c.b16 %v1927, %v1925
  %v1970 = vpack.c.b16 %v1928, %v1926
  %v1971 = vpack.c.b16 %v1931, %v1929
  %v1972 = vpack.c.b16 %v1932, %v1930
  %v1973 = vpack.c.b16 %v1935, %v1933
  %v1974 = vpack.c.b16 %v1936, %v1934
  %v1975 = vpack.c.b16 %v1939, %v1937
  %v1976 = vpack.c.b16 %v1940, %v1938
  %v1977 = vpack.c.b16 %v1943, %v1941
  %v1978 = vpack.c.b16 %v1944, %v1942
  %v1979 = vpack.c.b16 %v1947, %v1945
  %v1980 = vpack.c.b16 %v1948, %v1946
  %2013 = vmatprep.subr.bf16.mxu0 %v1964
  %2014 = vmatpush1.bf16.msra.mxu0 %v1963
  %2015 = vmatprep.subr.bf16.mxu0 %v1962
  %2016 = vmatpush1.bf16.msra.mxu0 %v1961
  %2017 = vmatprep.subr.bf16.mxu0 %v1960
  %2018 = vmatpush1.bf16.msra.mxu0 %v1959
  %2019 = vmatprep.subr.bf16.mxu0 %v1958
  %2020 = vmatpush1.bf16.msra.mxu0 %v1957
  %2021 = vmatprep.subr.bf16.mxu0 %v1956
  %2022 = vmatpush1.bf16.msra.mxu0 %v1955
  %2023 = vmatprep.subr.bf16.mxu0 %v1954
  %2024 = vmatpush1.bf16.msra.mxu0 %v1953
  %2025 = vmatprep.subr.bf16.mxu0 %v1952
  %2026 = vmatpush1.bf16.msra.mxu0 %v1951
  %2027 = vmatprep.subr.bf16.mxu0 %v1950
  %2028 = vmatpush1.bf16.msra.mxu0 %v1949
  %2029 = vmatprep.subr.bf16.mxu0 %v1980
  %2030 = vmatpush2.bf16.msra.mxu0 %v1979
  %2031 = vmatprep.subr.bf16.mxu0 %v1978
  %2032 = vmatpush2.bf16.msra.mxu0 %v1977
  %2033 = vmatprep.subr.bf16.mxu0 %v1976
  %2034 = vmatpush2.bf16.msra.mxu0 %v1975
  %2035 = vmatprep.subr.bf16.mxu0 %v1974
  %2036 = vmatpush2.bf16.msra.mxu0 %v1973
  %2037 = vmatprep.subr.bf16.mxu0 %v1972
  %2038 = vmatpush2.bf16.msra.mxu0 %v1971
  %2039 = vmatprep.subr.bf16.mxu0 %v1970
  %2040 = vmatpush2.bf16.msra.mxu0 %v1969
  %2041 = vmatprep.subr.bf16.mxu0 %v1968
  %2042 = vmatpush2.bf16.msra.mxu0 %v1967
  %2043 = vmatprep.subr.bf16.mxu0 %v1966
  %2044 = vmatpush2.bf16.msra.mxu0 %v1965
  %2045 = vmatprep.mubr.bf16.mxu0 %v1819
  %2046 = vmatmul.mubr.bf16.gmra.mxu0 %v1818
  %v2047 = vpop.f32.mrf.mxu0
  %v2048 = vadd.f32 0.0, %v2047
  %v2049 = vpop.f32.mrf.mxu0
  %v2050 = vadd.f32 0.0, %v2049
  %v2051 = vpop.f32.mrf.mxu0
  %v2052 = vadd.f32 0.0, %v2051
  %v2053 = vpop.f32.mrf.mxu0
  %v2054 = vadd.f32 0.0, %v2053
  %2055 = vdwg.mxu0
  %v2056 = vadd.f32 %v1778, %v2048
  %v2057 = vadd.f32 %v1780, %v2050
  %v2058 = vadd.f32 %v1782, %v2052
  %v2059 = vadd.f32 %v1784, %v2054
  %v2060 = vld [vmem:[%s5] sm:$0x1]
  %v2061 = vld [vmem:[%s6] sm:$0x1]
  %v2062 = vld [vmem:[%s7] sm:$0xff]
  %v2063 = vld [vmem:[%s7 + $0x8] sm:$0xff]
  %v2064 = vld [vmem:[%s7 + $0x10] sm:$0xff]
  %v2065 = vld [vmem:[%s7 + $0x18] sm:$0xff]
  %v2066 = vld [vmem:[%s7 + $0x20] sm:$0xff]
  %v2067 = vld [vmem:[%s7 + $0x28] sm:$0xff]
  %v2068 = vld [vmem:[%s7 + $0x30] sm:$0xff]
  %v2069 = vld [vmem:[%s7 + $0x38] sm:$0xff]
  %v2070 = vld [vmem:[%s7 + $0x40] sm:$0xff]
  %v2071 = vld [vmem:[%s7 + $0x48] sm:$0xff]
  %v2072 = vld [vmem:[%s7 + $0x50] sm:$0xff]
  %v2073 = vld [vmem:[%s7 + $0x58] sm:$0xff]
  %v2074 = vld [vmem:[%s7 + $0x60] sm:$0xff]
  %v2075 = vld [vmem:[%s7 + $0x68] sm:$0xff]
  %v2076 = vld [vmem:[%s7 + $0x70] sm:$0xff]
  %v2077 = vld [vmem:[%s7 + $0x78] sm:$0xff]
  %v2078 = vld [vmem:[%s7 + $0x80] sm:$0xff]
  %v2079 = vld [vmem:[%s7 + $0x88] sm:$0xff]
  %v2080 = vld [vmem:[%s7 + $0x90] sm:$0xff]
  %v2081 = vld [vmem:[%s7 + $0x98] sm:$0xff]
  %v2082 = vld [vmem:[%s7 + $0xa0] sm:$0xff]
  %v2083 = vld [vmem:[%s7 + $0xa8] sm:$0xff]
  %v2084 = vld [vmem:[%s7 + $0xb0] sm:$0xff]
  %v2085 = vld [vmem:[%s7 + $0xb8] sm:$0xff]
  %v2086 = vld [vmem:[%s7 + $0xc0] sm:$0xff]
  %v2087 = vld [vmem:[%s7 + $0xc8] sm:$0xff]
  %v2088 = vld [vmem:[%s7 + $0xd0] sm:$0xff]
  %v2089 = vld [vmem:[%s7 + $0xd8] sm:$0xff]
  %v2090 = vld [vmem:[%s7 + $0xe0] sm:$0xff]
  %v2091 = vld [vmem:[%s7 + $0xe8] sm:$0xff]
  %v2092 = vld [vmem:[%s7 + $0xf0] sm:$0xff]
  %v2093 = vld [vmem:[%s7 + $0xf8] sm:$0xff]
  %v2094 = vld [vmem:[%s8] sm:$0xff]
  %v2095 = vld [vmem:[%s8 + $0x8] sm:$0xff]
  %v2096 = vld [vmem:[%s8 + $0x10] sm:$0xff]
  %v2097 = vld [vmem:[%s8 + $0x18] sm:$0xff]
  %v2098 = vld [vmem:[%s8 + $0x20] sm:$0xff]
  %v2099 = vld [vmem:[%s8 + $0x28] sm:$0xff]
  %v2100 = vld [vmem:[%s8 + $0x30] sm:$0xff]
  %v2101 = vld [vmem:[%s8 + $0x38] sm:$0xff]
  %v2102 = vadd.f32 %v2056, %v2058
  %v2103 = vrot.slane %v2102, 4
  %v2104 = vadd.f32 %v2102, %v2103
  %v2105 = vrot.slane %v2104, 2
  %v2106 = vadd.f32 %v2104, %v2105
  %v2107 = vrot.slane %v2106, 1
  %v2108 = vadd.f32 %v2106, %v2107
  %v2109 = vadd.f32 %v2057, %v2059
  %v2110 = vrot.slane %v2109, 4
  %v2111 = vadd.f32 %v2109, %v2110
  %v2112 = vrot.slane %v2111, 2
  %v2113 = vadd.f32 %v2111, %v2112
  %v2114 = vrot.slane %v2113, 1
  %v2115 = vadd.f32 %v2113, %v2114
  %v2116 = vmul.f32 %v2056, %v2056
  %v2117 = vmul.f32 %v2057, %v2057
  %v2118 = vmul.f32 %v2058, %v2058
  %v2119 = vmul.f32 %v2059, %v2059
  %v2120 = vadd.f32 %v2116, %v2118
  %v2121 = vrot.slane %v2120, 4
  %v2122 = vadd.f32 %v2120, %v2121
  %v2123 = vrot.slane %v2122, 2
  %v2124 = vadd.f32 %v2122, %v2123
  %v2125 = vrot.slane %v2124, 1
  %v2126 = vadd.f32 %v2124, %v2125
  %v2127 = vadd.f32 %v2117, %v2119
  %v2128 = vrot.slane %v2127, 4
  %v2129 = vadd.f32 %v2127, %v2128
  %v2130 = vrot.slane %v2129, 2
  %v2131 = vadd.f32 %v2129, %v2130
  %v2132 = vrot.slane %v2131, 1
  %v2133 = vadd.f32 %v2131, %v2132
  %2134 = vmatprep.subr.mxu0 0.0
  %2135 = vmatpush1.msra.mxu0 %v2077
  %2136 = vmatprep.subr.mxu0 0.0
  %2137 = vmatpush1.msra.mxu0 %v2076
  %2138 = vmatprep.subr.mxu0 0.0
  %2139 = vmatpush1.msra.mxu0 %v2075
  %2140 = vmatprep.subr.mxu0 0.0
  %2141 = vmatpush1.msra.mxu0 %v2074
  %2142 = vmatprep.subr.mxu0 0.0
  %2143 = vmatpush1.msra.mxu0 %v2073
  %2144 = vmatprep.subr.mxu0 0.0
  %2145 = vmatpush1.msra.mxu0 %v2072
  %2146 = vmatprep.subr.mxu0 0.0
  %2147 = vmatpush1.msra.mxu0 %v2071
  %2148 = vmatprep.subr.mxu0 0.0
  %2149 = vmatpush1.msra.mxu0 %v2070
  %2150 = vmatprep.subr.mxu0 0.0
  %2151 = vmatpush1.msra.mxu0 %v2069
  %2152 = vmatprep.subr.mxu0 0.0
  %2153 = vmatpush1.msra.mxu0 %v2068
  %2154 = vmatprep.subr.mxu0 0.0
  %2155 = vmatpush1.msra.mxu0 %v2067
  %2156 = vmatprep.subr.mxu0 0.0
  %2157 = vmatpush1.msra.mxu0 %v2066
  %2158 = vmatprep.subr.mxu0 0.0
  %2159 = vmatpush1.msra.mxu0 %v2065
  %2160 = vmatprep.subr.mxu0 0.0
  %2161 = vmatpush1.msra.mxu0 %v2064
  %2162 = vmatprep.subr.mxu0 0.0
  %2163 = vmatpush1.msra.mxu0 %v2063
  %2164 = vmatprep.subr.mxu0 0.0
  %2165 = vmatpush1.msra.mxu0 %v2062
  %2166 = vmatprep.subr.mxu0 0.0
  %2167 = vmatpush2.msra.mxu0 %v2093
  %2168 = vmatprep.subr.mxu0 0.0
  %2169 = vmatpush2.msra.mxu0 %v2092
  %2170 = vmatprep.subr.mxu0 0.0
  %2171 = vmatpush2.msra.mxu0 %v2091
  %2172 = vmatprep.subr.mxu0 0.0
  %2173 = vmatpush2.msra.mxu0 %v2090
  %2174 = vmatprep.subr.mxu0 0.0
  %2175 = vmatpush2.msra.mxu0 %v2089
  %2176 = vmatprep.subr.mxu0 0.0
  %2177 = vmatpush2.msra.mxu0 %v2088
  %2178 = vmatprep.subr.mxu0 0.0
  %2179 = vmatpush2.msra.mxu0 %v2087
  %2180 = vmatprep.subr.mxu0 0.0
  %2181 = vmatpush2.msra.mxu0 %v2086
  %2182 = vmatprep.subr.mxu0 0.0
  %2183 = vmatpush2.msra.mxu0 %v2085
  %2184 = vmatprep.subr.mxu0 0.0
  %2185 = vmatpush2.msra.mxu0 %v2084
  %2186 = vmatprep.subr.mxu0 0.0
  %2187 = vmatpush2.msra.mxu0 %v2083
  %2188 = vmatprep.subr.mxu0 0.0
  %2189 = vmatpush2.msra.mxu0 %v2082
  %2190 = vmatprep.subr.mxu0 0.0
  %2191 = vmatpush2.msra.mxu0 %v2081
  %2192 = vmatprep.subr.mxu0 0.0
  %2193 = vmatpush2.msra.mxu0 %v2080
  %2194 = vmatprep.subr.mxu0 0.0
  %2195 = vmatpush2.msra.mxu0 %v2079
  %2196 = vmatprep.subr.mxu0 0.0
  %2197 = vmatpush2.msra.mxu0 %v2078
  %2198 = vmatprep.mubr.f32.mxu0 %v2115
  %2199 = vmatmul.mubr.f32.gmra.mxu0 %v2108
  %v2200 = vpop.f32.mrf.mxu0
  %v2201 = vadd.f32 0.0, %v2200
  %v2202 = vpop.f32.mrf.mxu0
  %2203 = vdwg.mxu0
  %2204 = vmatprep.subr.mxu0 0.0
  %2205 = vmatpush1.msra.mxu0 %v2077
  %2206 = vmatprep.subr.mxu0 0.0
  %2207 = vmatpush1.msra.mxu0 %v2076
  %2208 = vmatprep.subr.mxu0 0.0
  %2209 = vmatpush1.msra.mxu0 %v2075
  %2210 = vmatprep.subr.mxu0 0.0
  %2211 = vmatpush1.msra.mxu0 %v2074
  %2212 = vmatprep.subr.mxu0 0.0
  %2213 = vmatpush1.msra.mxu0 %v2073
  %2214 = vmatprep.subr.mxu0 0.0
  %2215 = vmatpush1.msra.mxu0 %v2072
  %2216 = vmatprep.subr.mxu0 0.0
  %2217 = vmatpush1.msra.mxu0 %v2071
  %2218 = vmatprep.subr.mxu0 0.0
  %2219 = vmatpush1.msra.mxu0 %v2070
  %2220 = vmatprep.subr.mxu0 0.0
  %2221 = vmatpush1.msra.mxu0 %v2069
  %2222 = vmatprep.subr.mxu0 0.0
  %2223 = vmatpush1.msra.mxu0 %v2068
  %2224 = vmatprep.subr.mxu0 0.0
  %2225 = vmatpush1.msra.mxu0 %v2067
  %2226 = vmatprep.subr.mxu0 0.0
  %2227 = vmatpush1.msra.mxu0 %v2066
  %2228 = vmatprep.subr.mxu0 0.0
  %2229 = vmatpush1.msra.mxu0 %v2065
  %2230 = vmatprep.subr.mxu0 0.0
  %2231 = vmatpush1.msra.mxu0 %v2064
  %2232 = vmatprep.subr.mxu0 0.0
  %2233 = vmatpush1.msra.mxu0 %v2063
  %2234 = vmatprep.subr.mxu0 0.0
  %2235 = vmatpush1.msra.mxu0 %v2062
  %2236 = vmatprep.subr.mxu0 0.0
  %2237 = vmatpush2.msra.mxu0 %v2093
  %2238 = vmatprep.subr.mxu0 0.0
  %2239 = vmatpush2.msra.mxu0 %v2092
  %2240 = vmatprep.subr.mxu0 0.0
  %2241 = vmatpush2.msra.mxu0 %v2091
  %2242 = vmatprep.subr.mxu0 0.0
  %2243 = vmatpush2.msra.mxu0 %v2090
  %2244 = vmatprep.subr.mxu0 0.0
  %2245 = vmatpush2.msra.mxu0 %v2089
  %2246 = vmatprep.subr.mxu0 0.0
  %2247 = vmatpush2.msra.mxu0 %v2088
  %2248 = vmatprep.subr.mxu0 0.0
  %2249 = vmatpush2.msra.mxu0 %v2087
  %2250 = vmatprep.subr.mxu0 0.0
  %2251 = vmatpush2.msra.mxu0 %v2086
  %2252 = vmatprep.subr.mxu0 0.0
  %2253 = vmatpush2.msra.mxu0 %v2085
  %2254 = vmatprep.subr.mxu0 0.0
  %2255 = vmatpush2.msra.mxu0 %v2084
  %2256 = vmatprep.subr.mxu0 0.0
  %2257 = vmatpush2.msra.mxu0 %v2083
  %2258 = vmatprep.subr.mxu0 0.0
  %2259 = vmatpush2.msra.mxu0 %v2082
  %2260 = vmatprep.subr.mxu0 0.0
  %2261 = vmatpush2.msra.mxu0 %v2081
  %2262 = vmatprep.subr.mxu0 0.0
  %2263 = vmatpush2.msra.mxu0 %v2080
  %2264 = vmatprep.subr.mxu0 0.0
  %2265 = vmatpush2.msra.mxu0 %v2079
  %2266 = vmatprep.subr.mxu0 0.0
  %2267 = vmatpush2.msra.mxu0 %v2078
  %2268 = vmatprep.mubr.f32.mxu0 %v2133
  %2269 = vmatmul.mubr.f32.gmra.mxu0 %v2126
  %v2270 = vpop.f32.mrf.mxu0
  %v2271 = vadd.f32 0.0, %v2270
  %v2272 = vpop.f32.mrf.mxu0
  %2273 = vdwg.mxu0
  %v2274 = vmul.f32 %v2201, 0.0078125
  %v2275 = vmul.f32 %v2271, 0.0078125
  %v2276 = vmul.f32 %v2274, %v2274
  %v2277 = vsub.f32 %v2275, %v2276
  %v2278 = vadd.f32 %v2277, 1e-05
  %v2279 = vrsqrt.pop %v2278
  %v2280 = vmul.f32 %v2060, %v2279
  %v2281 = vmul.f32 %v2274, %v2280
  %v2282 = vsub.f32 %v2061, %v2281
  %v2284 = vsel %vm1058, %v2280, 0
  %2286 = vmatprep.subr.mxu0 0.0
  %2287 = vmatpush1.msra.mxu0 0.0
  %2288 = vmatprep.subr.mxu0 0.0
  %2289 = vmatpush1.msra.mxu0 0.0
  %2290 = vmatprep.subr.mxu0 0.0
  %2291 = vmatpush1.msra.mxu0 0.0
  %2292 = vmatprep.subr.mxu0 0.0
  %2293 = vmatpush1.msra.mxu0 0.0
  %2294 = vmatprep.subr.mxu0 0.0
  %2295 = vmatpush1.msra.mxu0 0.0
  %2296 = vmatprep.subr.mxu0 0.0
  %2297 = vmatpush1.msra.mxu0 0.0
  %2298 = vmatprep.subr.mxu0 0.0
  %2299 = vmatpush1.msra.mxu0 0.0
  %2300 = vmatprep.subr.mxu0 0.0
  %2301 = vmatpush1.msra.mxu0 0.0
  %2302 = vmatprep.subr.mxu0 0.0
  %2303 = vmatpush1.msra.mxu0 0.0
  %2304 = vmatprep.subr.mxu0 0.0
  %2305 = vmatpush1.msra.mxu0 0.0
  %2306 = vmatprep.subr.mxu0 0.0
  %2307 = vmatpush1.msra.mxu0 0.0
  %2308 = vmatprep.subr.mxu0 0.0
  %2309 = vmatpush1.msra.mxu0 0.0
  %2310 = vmatprep.subr.mxu0 %v2101
  %2311 = vmatpush1.msra.mxu0 %v2100
  %2312 = vmatprep.subr.mxu0 %v2099
  %2313 = vmatpush1.msra.mxu0 %v2098
  %2314 = vmatprep.subr.mxu0 %v2097
  %2315 = vmatpush1.msra.mxu0 %v2096
  %2316 = vmatprep.subr.mxu0 %v2095
  %2317 = vmatpush1.msra.mxu0 %v2094
  %2318 = vmatprep.subr.mxu0 0.0
  %2319 = vmatpush2.msra.mxu0 0.0
  %2320 = vmatprep.subr.mxu0 0.0
  %2321 = vmatpush2.msra.mxu0 0.0
  %2322 = vmatprep.subr.mxu0 0.0
  %2323 = vmatpush2.msra.mxu0 0.0
  %2324 = vmatprep.subr.mxu0 0.0
  %2325 = vmatpush2.msra.mxu0 0.0
  %2326 = vmatprep.subr.mxu0 0.0
  %2327 = vmatpush2.msra.mxu0 0.0
  %2328 = vmatprep.subr.mxu0 0.0
  %2329 = vmatpush2.msra.mxu0 0.0
  %2330 = vmatprep.subr.mxu0 0.0
  %2331 = vmatpush2.msra.mxu0 0.0
  %2332 = vmatprep.subr.mxu0 0.0
  %2333 = vmatpush2.msra.mxu0 0.0
  %2334 = vmatprep.subr.mxu0 0.0
  %2335 = vmatpush2.msra.mxu0 0.0
  %2336 = vmatprep.subr.mxu0 0.0
  %2337 = vmatpush2.msra.mxu0 0.0
  %2338 = vmatprep.subr.mxu0 0.0
  %2339 = vmatpush2.msra.mxu0 0.0
  %2340 = vmatprep.subr.mxu0 0.0
  %2341 = vmatpush2.msra.mxu0 0.0
  %2342 = vmatprep.subr.mxu0 0.0
  %2343 = vmatpush2.msra.mxu0 0.0
  %2344 = vmatprep.subr.mxu0 0.0
  %2345 = vmatpush2.msra.mxu0 0.0
  %2346 = vmatprep.subr.mxu0 0.0
  %2347 = vmatpush2.msra.mxu0 0.0
  %2348 = vmatprep.subr.mxu0 0.0
  %2349 = vmatpush2.msra.mxu0 0.0
  %2350 = vmatprep.mubr.f32.mxu0 0.0
  %2351 = vmatmul.mubr.f32.gmra.mxu0 %v2284
  %v2352 = vpop.f32.mrf.mxu0
  %v2353 = vadd.f32 0.0, %v2352
  %v2354 = vpop.f32.mrf.mxu0
  %v2355 = vadd.f32 0.0, %v2354
  %2356 = vdwg.mxu0
  %v2358 = vsel %vm1058, %v2282, 0
  %2360 = vmatprep.subr.mxu0 0.0
  %2361 = vmatpush1.msra.mxu0 0.0
  %2362 = vmatprep.subr.mxu0 0.0
  %2363 = vmatpush1.msra.mxu0 0.0
  %2364 = vmatprep.subr.mxu0 0.0
  %2365 = vmatpush1.msra.mxu0 0.0
  %2366 = vmatprep.subr.mxu0 0.0
  %2367 = vmatpush1.msra.mxu0 0.0
  %2368 = vmatprep.subr.mxu0 0.0
  %2369 = vmatpush1.msra.mxu0 0.0
  %2370 = vmatprep.subr.mxu0 0.0
  %2371 = vmatpush1.msra.mxu0 0.0
  %2372 = vmatprep.subr.mxu0 0.0
  %2373 = vmatpush1.msra.mxu0 0.0
  %2374 = vmatprep.subr.mxu0 0.0
  %2375 = vmatpush1.msra.mxu0 0.0
  %2376 = vmatprep.subr.mxu0 0.0
  %2377 = vmatpush1.msra.mxu0 0.0
  %2378 = vmatprep.subr.mxu0 0.0
  %2379 = vmatpush1.msra.mxu0 0.0
  %2380 = vmatprep.subr.mxu0 0.0
  %2381 = vmatpush1.msra.mxu0 0.0
  %2382 = vmatprep.subr.mxu0 0.0
  %2383 = vmatpush1.msra.mxu0 0.0
  %2384 = vmatprep.subr.mxu0 %v2101
  %2385 = vmatpush1.msra.mxu0 %v2100
  %2386 = vmatprep.subr.mxu0 %v2099
  %2387 = vmatpush1.msra.mxu0 %v2098
  %2388 = vmatprep.subr.mxu0 %v2097
  %2389 = vmatpush1.msra.mxu0 %v2096
  %2390 = vmatprep.subr.mxu0 %v2095
  %2391 = vmatpush1.msra.mxu0 %v2094
  %2392 = vmatprep.subr.mxu0 0.0
  %2393 = vmatpush2.msra.mxu0 0.0
  %2394 = vmatprep.subr.mxu0 0.0
  %2395 = vmatpush2.msra.mxu0 0.0
  %2396 = vmatprep.subr.mxu0 0.0
  %2397 = vmatpush2.msra.mxu0 0.0
  %2398 = vmatprep.subr.mxu0 0.0
  %2399 = vmatpush2.msra.mxu0 0.0
  %2400 = vmatprep.subr.mxu0 0.0
  %2401 = vmatpush2.msra.mxu0 0.0
  %2402 = vmatprep.subr.mxu0 0.0
  %2403 = vmatpush2.msra.mxu0 0.0
  %2404 = vmatprep.subr.mxu0 0.0
  %2405 = vmatpush2.msra.mxu0 0.0
  %2406 = vmatprep.subr.mxu0 0.0
  %2407 = vmatpush2.msra.mxu0 0.0
  %2408 = vmatprep.subr.mxu0 0.0
  %2409 = vmatpush2.msra.mxu0 0.0
  %2410 = vmatprep.subr.mxu0 0.0
  %2411 = vmatpush2.msra.mxu0 0.0
  %2412 = vmatprep.subr.mxu0 0.0
  %2413 = vmatpush2.msra.mxu0 0.0
  %2414 = vmatprep.subr.mxu0 0.0
  %2415 = vmatpush2.msra.mxu0 0.0
  %2416 = vmatprep.subr.mxu0 0.0
  %2417 = vmatpush2.msra.mxu0 0.0
  %2418 = vmatprep.subr.mxu0 0.0
  %2419 = vmatpush2.msra.mxu0 0.0
  %2420 = vmatprep.subr.mxu0 0.0
  %2421 = vmatpush2.msra.mxu0 0.0
  %2422 = vmatprep.subr.mxu0 0.0
  %2423 = vmatpush2.msra.mxu0 0.0
  %2424 = vmatprep.mubr.f32.mxu0 0.0
  %2425 = vmatmul.mubr.f32.gmra.mxu0 %v2358
  %v2426 = vpop.f32.mrf.mxu0
  %v2427 = vadd.f32 0.0, %v2426
  %v2428 = vpop.f32.mrf.mxu0
  %v2429 = vadd.f32 0.0, %v2428
  %2430 = vdwg.mxu0
  %v2431 = vld [vmem:[%s0] sm:$0xfe]
  %v2432 = vld [vmem:[%s0 + $0x8] sm:$0xfe]
  %v2433 = vld [vmem:[%s0 + $0x10] sm:$0x1]
  %v2434 = vld [vmem:[%s0 + $0x18] sm:$0x1]
  %v2435 = vld [vmem:[%s0 + $0x10] sm:$0xf8]
  %v2436 = vld [vmem:[%s0 + $0x18] sm:$0xf8]
  %v2437 = vld [vmem:[%s0 + $0x20] sm:$0x7]
  %v2438 = vld [vmem:[%s0 + $0x28] sm:$0x7]
  %v2443 = vrot.slane %v2431, 1
  %v2444 = vrot.slane %v2433, 1
  %v2445 = vsel %vm97, %v2443, %v2444
  %v2446 = vrot.slane %v2432, 1
  %v2447 = vrot.slane %v2434, 1
  %v2448 = vsel %vm97, %v2446, %v2447
  %v2455 = vrot.slane %v2435, 3
  %v2456 = vrot.slane %v2437, 3
  %v2457 = vsel %vm110, %v2455, %v2456
  %v2458 = vrot.slane %v2436, 3
  %v2459 = vrot.slane %v2438, 3
  %v2460 = vsel %vm110, %v2458, %v2459
  %v2463 = vlaneseq
  %v2464 = vshrl.u32 %v2463, 7
  %v2465 = vsub.s32 0, %v2464
  %v2466 = vrot.slane %v2353, %v2465
  %v2467 = vlaneseq
  %v2468 = vshrl.u32 %v2467, 7
  %v2469 = vsub.s32 0, %v2468
  %v2470 = vrot.slane %v2355, %v2469
  %v2471 = vmul.f32 %v2056, %v2466
  %v2472 = vmul.f32 %v2057, %v2470
  %v2473 = vmul.f32 %v2058, %v2466
  %v2474 = vmul.f32 %v2059, %v2470
  %v2475 = vlaneseq
  %v2476 = vshrl.u32 %v2475, 7
  %v2477 = vsub.s32 0, %v2476
  %v2478 = vrot.slane %v2427, %v2477
  %v2479 = vlaneseq
  %v2480 = vshrl.u32 %v2479, 7
  %v2481 = vsub.s32 0, %v2480
  %v2482 = vrot.slane %v2429, %v2481
  %v2483 = vadd.f32 %v2471, %v2478
  %v2484 = vadd.f32 %v2472, %v2482
  %v2485 = vadd.f32 %v2473, %v2478
  %v2486 = vadd.f32 %v2474, %v2482
  %v2487 = vadd.f32 %v2483, %v2445
  %v2488 = vadd.f32 %v2484, %v2448
  %v2489 = vadd.f32 %v2485, %v2457
  %v2490 = vadd.f32 %v2486, %v2460
  %v2491 = vmax.f32 %v2487, 0.0
  %v2492 = vmax.f32 %v2488, 0.0
  %v2493 = vmax.f32 %v2489, 0.0
  %v2494 = vmax.f32 %v2490, 0.0
  %2495 = vst [vmem:[%s9] sm:$0xff] %v2491
  %2496 = vst [vmem:[%s9 + $0x8] sm:$0xff] %v2492
  %2497 = vst [vmem:[%s9 + $0x10] sm:$0xff] %v2493
  %2498 = vst [vmem:[%s9 + $0x18] sm:$0xff] %v2494
  // Predicated region
  $region38: #{res_block_forward.1} parent=0 // pred_check
    _
  $region39: #{res_block_forward.1} parent=0 // pred_check_branch
    %2500 = sbr.rel (0) target = $region41
  $region40: #{res_block_forward.1} parent=0 // pred_region
    _
  $region41: #{res_block_forward.1} parent=0 // pred_fallthru
    _
  // Predicated region
  $region42: #{res_block_forward.1} parent=0 // pred_check
    _
  $region43: #{res_block_forward.1} parent=0 // pred_check_branch
    %2502 = sbr.rel (0) target = $region45
  $region44: #{res_block_forward.1} parent=0 // pred_region
    _
  $region45: #{res_block_forward.1} parent=0 // pred_fallthru
    _

</llo_original>
